<compile_context>
chip_gen: v7x
topology: tpu7x:2x2x1
jax: 0.10.0
libtpu: 0.0.40
codegen_flags: <defaults>
</compile_context>

<pallas_src>
import jax
import jax.numpy as jnp
import numpy as np
from jax.experimental import pallas as pl
from jax.experimental.pallas import tpu as pltpu

CLIP_STD = (0.26862954, 0.26130258, 0.27577711)
CLIP_MEAN = (0.48145466, 0.4578275, 0.40821073)

_POOL_OUT = 112                      # face_pool_2 target
_CROP_H = (35, 223)                  # rows kept after face_pool_1
_CROP_W = (32, 220)                  # cols kept after face_pool_1
_FEAT_DIM = 512
_FLAT_K = 3 * _POOL_OUT * _POOL_OUT  # 37632


# ---------------------------------------------------------------------------
# Host-side pool matrices: fold face_pool_1 (if input != 256) + crop +
# face_pool_2 into one (112, H) matrix per axis.  Rows sum to 1, so the
# per-channel affine (un_norm_clip + Normalize) commutes with the pooling
# and can be applied to the 112x112 result instead of the full image.
# For the 256-input path all weights are {0, 1, 0.5}, i.e. exact in bf16.
# ---------------------------------------------------------------------------
def _adaptive_pool_matrix(in_size, out_size):
    P = np.zeros((out_size, in_size), dtype=np.float32)
    for i in range(out_size):
        s = (i * in_size) // out_size
        e = -((-(i + 1) * in_size) // out_size)   # ceil((i+1)*in/out)
        P[i, s:e] = 1.0 / (e - s)
    return P


def _axis_pool_matrix(n, crop):
    if n != 256:
        A = _adaptive_pool_matrix(n, 256)          # face_pool_1 along this axis
    else:
        A = np.eye(256, dtype=np.float32)          # face_pool_1 skipped
    A = A[crop[0]:crop[1], :]                      # crop
    # face_pool_2 (188 -> 112) composed with the above; rows still sum to 1.
    return _adaptive_pool_matrix(crop[1] - crop[0], _POOL_OUT) @ A   # (112, n)


def _num_tensorcores_per_chip():
    """v7x has 2 TensorCores per chip; v5e/v6e have 1 (drives kp below)."""
    try:
        kind = jax.devices()[0].device_kind.lower()
    except Exception:
        return 1
    return 2 if ("v7" in kind or "7x" in kind) else 1


# ---------------------------------------------------------------------------
# Kernel 1: fused clip-norm + crop + adaptive pooling.
# Grid = (num_images,).  The (B,3,H,W) image is pre-flattened to (B,3H,W) on
# the host (contiguous leading-dim merge) so all 3 channels share one MXU
# matmul with M=3H, and the result is written in bf16 for kernel 2.
# ---------------------------------------------------------------------------
def _make_pool_kernel(scales, shifts, H):
    def kernel(x_ref, ph_ref, pwt_ref, o_ref):
        x3 = x_ref[0].astype(jnp.bfloat16)                              # (3H, W)
        tmp = jnp.dot(x3, pwt_ref[...],
                      preferred_element_type=jnp.float32)               # (3H, 112)
        for c in range(3):
            pooled = jnp.dot(ph_ref[...],
                             tmp[c * H:(c + 1) * H].astype(jnp.bfloat16),
                             preferred_element_type=jnp.float32)        # (112, 112)
            o_ref[0, c] = (pooled * scales[c] + shifts[c]).astype(o_ref.dtype)
    return kernel


def pool_crop_normalize(x, clip_img=True):
    """un_norm_clip + Normalize(.5,.5) + face_pool_1 + crop + face_pool_2."""
    B, C, H, W = x.shape
    assert C == 3
    if clip_img:
        # per-channel: y = (x*std + mean - 0.5)/0.5 = x*(2*std) + (2*mean - 1)
        scales = tuple(2.0 * s for s in CLIP_STD)
        shifts = tuple(2.0 * m - 1.0 for m in CLIP_MEAN)
    else:
        scales = (1.0, 1.0, 1.0)
        shifts = (0.0, 0.0, 0.0)
    Ph = jnp.asarray(_axis_pool_matrix(H, _CROP_H), dtype=jnp.bfloat16)     # (112, H)
    PwT = jnp.asarray(_axis_pool_matrix(W, _CROP_W).T, dtype=jnp.bfloat16)  # (W, 112)
    x3 = x.reshape(B, C * H, W)   # contiguous leading-dim merge, done outside the kernel
    out = pl.pallas_call(
        _make_pool_kernel(scales, shifts, H),
        out_shape=jax.ShapeDtypeStruct((B, 3, _POOL_OUT, _POOL_OUT), jnp.bfloat16),
        grid_spec=pltpu.PrefetchScalarGridSpec(
            num_scalar_prefetch=0,
            grid=(B,),
            in_specs=[
                pl.BlockSpec((1, C * H, W), lambda b: (b, 0, 0)),
                pl.BlockSpec((_POOL_OUT, H), lambda b: (0, 0)),
                pl.BlockSpec((W, _POOL_OUT), lambda b: (0, 0)),
            ],
            out_specs=pl.BlockSpec((1, 3, _POOL_OUT, _POOL_OUT),
                                   lambda b: (b, 0, 0, 0)),
        ),
        compiler_params=pltpu.CompilerParams(dimension_semantics=("parallel",)),
    )(x3, Ph, PwT)
    # TODO(synk): the (B,3,112,112)->(B,37632) flatten stays outside the kernel
    # (a tiny ~300 KB XLA relayout); an in-kernel (112,112)->(12544,) lane
    # reshape is not reliably lowerable, and the cost here is ~1 us.
    return out.reshape(B, 3 * _POOL_OUT * _POOL_OUT)


# ---------------------------------------------------------------------------
# Kernel 2: backbone stand-in — K-tiled projection with an INT8 weight stream
# (dequantized to bf16 on the VPU, hidden under the weight DMA) and f32
# accumulation directly in the (resident) output block.  The per-output-
# channel dequant scale is applied later, in kernel 3 (it commutes with the
# K-sum).  The K reduction is split across a leading "parallel" axis of size
# `kp` so both v7x TensorCores stream half the weight each.
# TODO(synk): the IR-SE-50 `Backbone` class/weights are not provided (the
# module loads a .pth checkpoint); a fixed linear projection + l2_norm stands
# in for self.facenet(x).
# TODO(synk): on v5e/v6e the MXU could take int8 operands directly (quantized
# activations); the portable int8-in-HBM + VPU-dequant path is used instead.
# ---------------------------------------------------------------------------
def _proj_kernel(x_ref, w_ref, part_ref):
    @pl.when(pl.program_id(1) == 0)
    def _():
        part_ref[...] = jnp.zeros_like(part_ref)

    w_bf16 = w_ref[...].astype(jnp.bfloat16)            # VPU dequant (scale applied later)
    part_ref[...] += jnp.dot(x_ref[...], w_bf16,
                             preferred_element_type=jnp.float32)


def project_partials(x_flat, w_i8, tk=6272, kp=None):
    N, K = x_flat.shape
    K2, D = w_i8.shape
    assert K == K2 and w_i8.dtype == jnp.int8
    if kp is None:
        kp = min(2, _num_tensorcores_per_chip())         # 2 on v7x, 1 on v5e/v6e
    assert tk % 128 == 0 and K % (tk * kp) == 0
    nkh = K // (tk * kp)          # k-steps per parallel slice

    x_spec = pl.BlockSpec((N, tk), lambda p, k: (0, p * nkh + k))
    out_spec = pl.BlockSpec((None, N, D), lambda p, k: (p, 0, 0))
    w_idx = lambda p, k: (p * nkh + k, 0)

    def _call(w_spec):
        return pl.pallas_call(
            _proj_kernel,
            out_shape=jax.ShapeDtypeStruct((kp, N, D), jnp.float32),
            grid_spec=pltpu.PrefetchScalarGridSpec(
                num_scalar_prefetch=0,
                grid=(kp, nkh),
                in_specs=[x_spec, w_spec],
                out_specs=out_spec,
            ),
            compiler_params=pltpu.CompilerParams(
                dimension_semantics=("parallel", "arbitrary"),
                vmem_limit_bytes=32 * 1024 * 1024,   # ~10 MB actual need; safe on v7x
            ),
        )(x_flat, w_i8)

    try:
        # Triple-buffer the dominant, purely HBM-bound int8 weight stream.
        return _call(pl.BlockSpec((tk, D), w_idx, pipeline_mode=pl.Buffered(3)))
    except Exception:
        return _call(pl.BlockSpec((tk, D), w_idx))


# ---------------------------------------------------------------------------
# Kernel 3: combine K-partials, apply the int8 dequant scale, l2_norm
# (backbone epilogue), and the identity-similarity loss.  First B rows are
# y_hat features, last B are y.
#   sim_target[i] = <yhat_i, y_i>;  sim_views[i] = <y_i, y_i> == 1 post-l2
#   loss = mean(1 - sim_target);  sim_improvement = mean(sim_target) - 1
# ---------------------------------------------------------------------------
def _loss_kernel(part_ref, scale_ref, loss_ref, imp_ref, sep_ref):
    acc = jnp.sum(part_ref[...], axis=0) * scale_ref[...]            # (2B, 512)
    inv = jax.lax.rsqrt(jnp.sum(acc * acc, axis=-1, keepdims=True) + 1e-12)
    feats = acc * inv                                                 # l2_norm
    B = sep_ref.shape[0]
    yh = feats[:B]
    y = feats[B:]
    sim_t = jnp.sum(yh * y, axis=-1, keepdims=True)                   # (B, 1)
    loss_ref[...] = jnp.mean(1.0 - sim_t).reshape(1, 1)
    imp_ref[...] = (jnp.mean(sim_t) - 1.0).reshape(1, 1)              # sim_views == 1
    sep_ref[...] = sim_t


def combine_and_loss(partials, w_scale, batch):
    loss, imp, sep = pl.pallas_call(
        _loss_kernel,
        out_shape=(
            jax.ShapeDtypeStruct((1, 1), jnp.float32),
            jax.ShapeDtypeStruct((1, 1), jnp.float32),
            jax.ShapeDtypeStruct((batch, 1), jnp.float32),
        ),
    )(partials, w_scale)
    return loss[0, 0], imp[0, 0], sep[:, 0]


# ---------------------------------------------------------------------------
# Weight quantization (one-time, host/XLA side): per-output-channel symmetric
# int8.  The dequant scale is applied to the f32 accumulator in kernel 3.
# ---------------------------------------------------------------------------
def quantize_weight(w_f32):
    scale = jnp.max(jnp.abs(w_f32), axis=0, keepdims=True) / 127.0    # (1, D)
    scale = jnp.maximum(scale, 1e-12)
    w_i8 = jnp.clip(jnp.round(w_f32 / scale), -127.0, 127.0).astype(jnp.int8)
    return w_i8, scale.astype(jnp.float32)


# ---------------------------------------------------------------------------
# Arcface.forward (multiscale=False -> single feature scale)
# ---------------------------------------------------------------------------
def arcface_forward(y_hat, y, w_i8, w_scale, clip_img=True, return_seperate=False):
    B = y.shape[0]

    # Run the (identical) image pipeline and backbone ONCE for y_hat and y.
    # If many image pairs are evaluated per step, batch them into one call:
    # the ~19 MB int8 weight stream is re-read once per call and dominates.
    x_all = jnp.concatenate([y_hat, y], axis=0)                # (2B, 3, H, W)
    x_flat = pool_crop_normalize(x_all, clip_img=clip_img)     # (2B, 37632) bf16
    partials = project_partials(x_flat, w_i8)                  # (kp, 2B, 512) f32

    # TODO(synk): the reference .detach()'s the y features; forward values are
    # identical, so stop_gradient is omitted in this fused forward-only path.
    loss, imp, sep = combine_and_loss(partials, w_scale, B)
    if return_seperate:
        return loss, imp, [sep]
    return loss, imp, None


if __name__ == "__main__":
    key = jax.random.PRNGKey(0)
    k1, k2, k3 = jax.random.split(key, 3)

    B, C, H, W = 2, 3, 256, 256                  # spatial 256 -> face_pool_1 skipped
    y_hat = jax.random.normal(k1, (B, C, H, W), jnp.float32)
    y = jax.random.normal(k2, (B, C, H, W), jnp.float32)

    # Deterministic stand-in "backbone" projection weights, quantized to int8.
    K_flat, D_feat = _FLAT_K, _FEAT_DIM
    w_f32 = (jax.random.normal(k3, (K_flat, D_feat), jnp.float32)
             / jnp.sqrt(jnp.float32(K_flat)))
    w_i8, w_scale = quantize_weight(w_f32)

    loss, sim_improvement, _ = arcface_forward(y_hat, y, w_i8, w_scale)
    jax.block_until_ready((loss, sim_improvement))
    print("KERNEL_OK")
</pallas_src>

<mosaic_0001>
module attributes {stable_mosaic.version = 11 : i64} {
  func.func @kernel(%arg0: i32, %arg1: memref<1x768x256xf32, #tpu.memory_space<vmem>>, %arg2: memref<112x256xbf16, #tpu.memory_space<vmem>>, %arg3: memref<256x112xbf16, #tpu.memory_space<vmem>>, %arg4: memref<1x3x112x112xbf16, #tpu.memory_space<vmem>>) attributes {dimension_semantics = [#tpu.dimension_semantics<parallel>], iteration_bounds = array<i64: 4>, scalar_prefetch = 0 : i64, scratch_operands = 0 : i64, tpu.core_type = #tpu.core_type<tc>, window_params = [{transform_indices = @transform_0, window_bounds = array<i64: 1, 768, 256>}, {pipeline_mode = #tpu.pipeline_mode<synchronous>, transform_indices = @transform_1, window_bounds = array<i64: 112, 256>}, {pipeline_mode = #tpu.pipeline_mode<synchronous>, transform_indices = @transform_2, window_bounds = array<i64: 256, 112>}, {transform_indices = @transform_3, window_bounds = array<i64: 1, 3, 112, 112>}]} {
    %c0 = arith.constant 0 : index
    %c0_0 = arith.constant 0 : index
    %c0_1 = arith.constant 0 : index
    %0 = vector.load %arg1[%c0, %c0_0, %c0_1] : memref<1x768x256xf32, #tpu.memory_space<vmem>>, vector<1x768x256xf32>
    %1 = vector.shape_cast %0 : vector<1x768x256xf32> to vector<768x256xf32>
    %2 = arith.truncf %1 : vector<768x256xf32> to vector<768x256xbf16>
    %c0_2 = arith.constant 0 : index
    %c0_3 = arith.constant 0 : index
    %3 = vector.load %arg3[%c0_2, %c0_3] : memref<256x112xbf16, #tpu.memory_space<vmem>>, vector<256x112xbf16>
    %cst = arith.constant dense<0.000000e+00> : vector<768x112xf32>
    %4 = tpu.matmul %2, %3, %cst {dimension_numbers = #tpu.dot_dimension_numbers<[1], [0], [0], [1], [0, 0, 1, 1], [], []>} : vector<768x256xbf16>, vector<256x112xbf16>, vector<768x112xf32> -> vector<768x112xf32>
    %c0_4 = arith.constant 0 : index
    %c0_5 = arith.constant 0 : index
    %5 = vector.load %arg2[%c0_4, %c0_5] : memref<112x256xbf16, #tpu.memory_space<vmem>>, vector<112x256xbf16>
    %6 = vector.extract_strided_slice %4 {offsets = [0, 0], sizes = [256, 112], strides = [1, 1]} : vector<768x112xf32> to vector<256x112xf32>
    %7 = arith.truncf %6 : vector<256x112xf32> to vector<256x112xbf16>
    %cst_6 = arith.constant dense<0.000000e+00> : vector<112x112xf32>
    %8 = tpu.matmul %5, %7, %cst_6 {dimension_numbers = #tpu.dot_dimension_numbers<[1], [0], [0], [1], [0, 0, 1, 1], [], []>} : vector<112x256xbf16>, vector<256x112xbf16>, vector<112x112xf32> -> vector<112x112xf32>
    %cst_7 = arith.constant 0.537259102 : f32
    %9 = vector.broadcast %cst_7 : f32 to vector<112x112xf32>
    %10 = arith.mulf %8, %9 : vector<112x112xf32>
    %cst_8 = arith.constant -0.0370906815 : f32
    %11 = vector.broadcast %cst_8 : f32 to vector<112x112xf32>
    %12 = arith.addf %10, %11 : vector<112x112xf32>
    %13 = arith.truncf %12 : vector<112x112xf32> to vector<112x112xbf16>
    %c0_9 = arith.constant 0 : index
    %c0_10 = arith.constant 0 : index
    %c0_11 = arith.constant 0 : index
    %c0_12 = arith.constant 0 : index
    %14 = vector.load %arg4[%c0_9, %c0_10, %c0_11, %c0_12] : memref<1x3x112x112xbf16, #tpu.memory_space<vmem>>, vector<1x1x112x112xbf16>
    %15 = vector.shape_cast %14 : vector<1x1x112x112xbf16> to vector<112x112xbf16>
    %16 = vector.shape_cast %13 : vector<112x112xbf16> to vector<1x1x112x112xbf16>
    tpu.vector_store %arg4[%c0_9, %c0_10, %c0_11, %c0_12], %16 {strides = array<i32>} : memref<1x3x112x112xbf16, #tpu.memory_space<vmem>>, vector<1x1x112x112xbf16>,
    %c0_13 = arith.constant 0 : index
    %c0_14 = arith.constant 0 : index
    %17 = vector.load %arg2[%c0_13, %c0_14] : memref<112x256xbf16, #tpu.memory_space<vmem>>, vector<112x256xbf16>
    %18 = vector.extract_strided_slice %4 {offsets = [256, 0], sizes = [256, 112], strides = [1, 1]} : vector<768x112xf32> to vector<256x112xf32>
    %19 = arith.truncf %18 : vector<256x112xf32> to vector<256x112xbf16>
    %cst_15 = arith.constant dense<0.000000e+00> : vector<112x112xf32>
    %20 = tpu.matmul %17, %19, %cst_15 {dimension_numbers = #tpu.dot_dimension_numbers<[1], [0], [0], [1], [0, 0, 1, 1], [], []>} : vector<112x256xbf16>, vector<256x112xbf16>, vector<112x112xf32> -> vector<112x112xf32>
    %cst_16 = arith.constant 0.522605181 : f32
    %21 = vector.broadcast %cst_16 : f32 to vector<112x112xf32>
    %22 = arith.mulf %20, %21 : vector<112x112xf32>
    %cst_17 = arith.constant -8.434500e-02 : f32
    %23 = vector.broadcast %cst_17 : f32 to vector<112x112xf32>
    %24 = arith.addf %22, %23 : vector<112x112xf32>
    %25 = arith.truncf %24 : vector<112x112xf32> to vector<112x112xbf16>
    %c0_18 = arith.constant 0 : index
    %c1 = arith.constant 1 : index
    %c0_19 = arith.constant 0 : index
    %c0_20 = arith.constant 0 : index
    %26 = vector.load %arg4[%c0_18, %c1, %c0_19, %c0_20] : memref<1x3x112x112xbf16, #tpu.memory_space<vmem>>, vector<1x1x112x112xbf16>
    %27 = vector.shape_cast %26 : vector<1x1x112x112xbf16> to vector<112x112xbf16>
    %28 = vector.shape_cast %25 : vector<112x112xbf16> to vector<1x1x112x112xbf16>
    tpu.vector_store %arg4[%c0_18, %c1, %c0_19, %c0_20], %28 {strides = array<i32>} : memref<1x3x112x112xbf16, #tpu.memory_space<vmem>>, vector<1x1x112x112xbf16>,
    %c0_21 = arith.constant 0 : index
    %c0_22 = arith.constant 0 : index
    %29 = vector.load %arg2[%c0_21, %c0_22] : memref<112x256xbf16, #tpu.memory_space<vmem>>, vector<112x256xbf16>
    %30 = vector.extract_strided_slice %4 {offsets = [512, 0], sizes = [256, 112], strides = [1, 1]} : vector<768x112xf32> to vector<256x112xf32>
    %31 = arith.truncf %30 : vector<256x112xf32> to vector<256x112xbf16>
    %cst_23 = arith.constant dense<0.000000e+00> : vector<112x112xf32>
    %32 = tpu.matmul %29, %31, %cst_23 {dimension_numbers = #tpu.dot_dimension_numbers<[1], [0], [0], [1], [0, 0, 1, 1], [], []>} : vector<112x256xbf16>, vector<256x112xbf16>, vector<112x112xf32> -> vector<112x112xf32>
    %cst_24 = arith.constant 0.551554203 : f32
    %33 = vector.broadcast %cst_24 : f32 to vector<112x112xf32>
    %34 = arith.mulf %32, %33 : vector<112x112xf32>
    %cst_25 = arith.constant -0.183578536 : f32
    %35 = vector.broadcast %cst_25 : f32 to vector<112x112xf32>
    %36 = arith.addf %34, %35 : vector<112x112xf32>
    %37 = arith.truncf %36 : vector<112x112xf32> to vector<112x112xbf16>
    %c0_26 = arith.constant 0 : index
    %c2 = arith.constant 2 : index
    %c0_27 = arith.constant 0 : index
    %c0_28 = arith.constant 0 : index
    %38 = vector.load %arg4[%c0_26, %c2, %c0_27, %c0_28] : memref<1x3x112x112xbf16, #tpu.memory_space<vmem>>, vector<1x1x112x112xbf16>
    %39 = vector.shape_cast %38 : vector<1x1x112x112xbf16> to vector<112x112xbf16>
    %40 = vector.shape_cast %37 : vector<112x112xbf16> to vector<1x1x112x112xbf16>
    tpu.vector_store %arg4[%c0_26, %c2, %c0_27, %c0_28], %40 {strides = array<i32>} : memref<1x3x112x112xbf16, #tpu.memory_space<vmem>>, vector<1x1x112x112xbf16>,
    return
  }
  func.func @transform_0(%arg0: i32) -> (i32, i32, i32) {
    %c0_i32 = arith.constant 0 : i32
    %c0_i32_0 = arith.constant 0 : i32
    %c0_i32_1 = arith.constant 0 : i32
    return %arg0, %c0_i32, %c0_i32_0 : i32, i32, i32
  }
  func.func @transform_1(%arg0: i32) -> (i32, i32) {
    %c0_i32 = arith.constant 0 : i32
    %c0_i32_0 = arith.constant 0 : i32
    %c0_i32_1 = arith.constant 0 : i32
    return %c0_i32, %c0_i32_0 : i32, i32
  }
  func.func @transform_2(%arg0: i32) -> (i32, i32) {
    %c0_i32 = arith.constant 0 : i32
    %c0_i32_0 = arith.constant 0 : i32
    %c0_i32_1 = arith.constant 0 : i32
    return %c0_i32, %c0_i32_0 : i32, i32
  }
  func.func @transform_3(%arg0: i32) -> (i32, i32, i32, i32) {
    %c0_i32 = arith.constant 0 : i32
    %c0_i32_0 = arith.constant 0 : i32
    %c0_i32_1 = arith.constant 0 : i32
    %c0_i32_2 = arith.constant 0 : i32
    return %arg0, %c0_i32, %c0_i32_0, %c0_i32_1 : i32, i32, i32, i32
  }
}

</mosaic_0001>

<llo_original>
// kernel: tpu_custom_call.1
$region0: #{tpu_custom_call.1}
  #allocation0 [shape = 'u32[]', space=smem, size = 0x4, offset = 0x4, fixed_abs, tag = 'smem constant byte address 0x4 - core index']
  #allocation1 [shape = 'u32[144,128]{1,0:T(1,128)}', space=vmem, size = 0x12000, scoped, tag = 'internal scratch']
  %s0 = inlined_call_operand.hbm [shape: f32[4,768,256], index: 0, kind: input, shape index: {}]
  %s1 = inlined_call_operand.hbm [shape: bf16[112,256], index: 1, kind: input, shape index: {}]
  %s2 = inlined_call_operand.vmem [shape: bf16[256,112], index: 2, kind: input, shape index: {}]
  %s3 = inlined_call_operand.hbm [shape: bf16[4,3,112,112], index: 3, kind: output, shape index: {}]
  %s4 = sld [smem:[#allocation0]]
  $region53: #{tpu_custom_call.1} parent=0
    _
  %s6 = ssub.s32 1, %s4
  %s7 = scalar_select 0, %s6, %s4
  $region1: #{tpu_custom_call.1} parent=0
    #allocation2 [shape = 'u8[1572864]{0}', space=vmem, size = 0x180000, scoped, tag = 'input window, operand 0']
    #allocation3 [shape = 's32[2]{0}', space=sflag, size = 0x8, scoped, tag = 'scoped memory for tpu_custom_call.1']
    #allocation4 [shape = 's32[2]{0}', space=sflag, size = 0x8, scoped, tag = 'scoped memory for tpu_custom_call.1']
    #allocation5 [shape = 'u8[57344]{0}', space=vmem, size = 0xe000, scoped, tag = 'input window, operand 1, single buffered']
    #allocation6 [shape = 's32[1]{0}', space=sflag, size = 0x4, scoped, tag = 'scoped memory for tpu_custom_call.1']
    #allocation7 [shape = 'u8[172032]{0}', space=vmem, size = 0x2a000, scoped, tag = 'output window, operand 0']
    %8 = vsyncpa [#allocation3], 0
    %s9 = scalar_lea.sflag [#allocation3], 1
    %10 = vsyncpa %s9, 0
    %11 = vsyncpa [#allocation6], 0
    %12 = vsyncpa [#allocation4], 0
    %s13 = scalar_lea.sflag [#allocation4], 1
    %14 = vsyncpa %s13, 0
    loop: start=0, step=1, limit=6
    $region2: #{tpu_custom_call.1} parent=1 // loop_pre_header
      _
    $region3: #{tpu_custom_call.1} parent=1 // loop_header
      %s16 = sphi 0, %s20
      %p17 = scmp.ge.s32.totalorder %s16, 6
      %s26 = sphi 0, %s28
      %s29 = sphi 0, %s26
      %s30 = sphi 0, %s29
      %s46 = sphi 0, %s30
      %s50 = sphi 0, %s50
      %s52 = sphi 0, %s50
      %s53 = sphi 0, %s52
      %s67 = sphi 0, %s53
      %s71 = sphi 0, %s71
      %s73 = sphi 0, %s71
      %s74 = sphi 0, %s73
      %s88 = sphi 0, %s74
      %s94 = sphi 0, %s96
      %s97 = sphi 0, %s94
      %s98 = sphi 0, %s97
      %s114 = sphi 0, %s98
    $region4: #{tpu_custom_call.1} parent=1 // loop_header_branch
      %19 = sbr.rel (%p17) target = $region8
    $region5: #{tpu_custom_call.1} parent=1 // loop_body
      %s21 = ssub.s32 %s16, 1
      %s22 = ssub.s32 %s16, 2
      %s23 = sadd.s32 %s16, 1
      %s24 = ssub.s32 %s16, %s23
      %p25 = scmp.eq.s32.totalorder %s24, 0
      %s27 = sadd.s32 %s26, 1
      %s28 = scalar_select %p25, %s26, %s27
      %p31 = pneg %p25
      %p32 = scmp.eq.s32.totalorder %s16, 3
      %p33 = por %p31, %p32
      %p34 = scmp.ne.s32.totalorder %s26, %s29
      %p35 = scmp.eq.s32.totalorder %s16, 0
      %p36 = por %p34, %p35
      %p37 = scmp.ne.s32.totalorder %s26, %s29
      %p38 = scmp.eq.s32.totalorder %s21, 3
      %p39 = por %p37, %p38
      %p40 = scmp.ne.s32.totalorder %s29, %s30
      %p41 = scmp.eq.s32.totalorder %s21, 0
      %p42 = por %p40, %p41
      %p43 = scmp.ne.s32.totalorder %s29, %s30
      %p44 = scmp.eq.s32.totalorder %s22, 3
      %p45 = por %p43, %p44
      %p47 = scmp.ne.s32.totalorder %s30, %s46
      %p48 = scmp.eq.s32.totalorder %s22, 0
      %p49 = por %p47, %p48
      %s51 = sadd.s32 %s50, 1
      %p54 = scmp.eq.s32.totalorder %s16, 3
      %p55 = scmp.ne.s32.totalorder %s50, %s52
      %p56 = scmp.eq.s32.totalorder %s16, 0
      %p57 = por %p55, %p56
      %p58 = scmp.ne.s32.totalorder %s50, %s52
      %p59 = scmp.eq.s32.totalorder %s21, 3
      %p60 = por %p58, %p59
      %p61 = scmp.ne.s32.totalorder %s52, %s53
      %p62 = scmp.eq.s32.totalorder %s21, 0
      %p63 = por %p61, %p62
      %p64 = scmp.ne.s32.totalorder %s52, %s53
      %p65 = scmp.eq.s32.totalorder %s22, 3
      %p66 = por %p64, %p65
      %p68 = scmp.ne.s32.totalorder %s53, %s67
      %p69 = scmp.eq.s32.totalorder %s22, 0
      %p70 = por %p68, %p69
      %s72 = sadd.s32 %s71, 1
      %p75 = scmp.eq.s32.totalorder %s16, 3
      %p76 = scmp.ne.s32.totalorder %s71, %s73
      %p77 = scmp.eq.s32.totalorder %s16, 0
      %p78 = por %p76, %p77
      %p79 = scmp.ne.s32.totalorder %s71, %s73
      %p80 = scmp.eq.s32.totalorder %s21, 3
      %p81 = por %p79, %p80
      %p82 = scmp.ne.s32.totalorder %s73, %s74
      %p83 = scmp.eq.s32.totalorder %s21, 0
      %p84 = por %p82, %p83
      %p85 = scmp.ne.s32.totalorder %s73, %s74
      %p86 = scmp.eq.s32.totalorder %s22, 3
      %p87 = por %p85, %p86
      %p89 = scmp.ne.s32.totalorder %s74, %s88
      %p90 = scmp.eq.s32.totalorder %s22, 0
      %p91 = por %p89, %p90
      %s92 = ssub.s32 %s16, %s23
      %p93 = scmp.eq.s32.totalorder %s92, 0
      %s95 = sadd.s32 %s94, 1
      %s96 = scalar_select %p93, %s94, %s95
      %p99 = pneg %p93
      %p100 = scmp.eq.s32.totalorder %s16, 3
      %p101 = por %p99, %p100
      %p102 = scmp.ne.s32.totalorder %s94, %s97
      %p103 = scmp.eq.s32.totalorder %s16, 0
      %p104 = por %p102, %p103
      %p105 = scmp.ne.s32.totalorder %s94, %s97
      %p106 = scmp.eq.s32.totalorder %s21, 3
      %p107 = por %p105, %p106
      %p108 = scmp.ne.s32.totalorder %s97, %s98
      %p109 = scmp.eq.s32.totalorder %s21, 0
      %p110 = por %p108, %p109
      %p111 = scmp.ne.s32.totalorder %s97, %s98
      %p112 = scmp.eq.s32.totalorder %s22, 3
      %p113 = por %p111, %p112
      %p115 = scmp.ne.s32.totalorder %s98, %s114
      %p116 = scmp.eq.s32.totalorder %s22, 0
      %p117 = por %p115, %p116
      %p118 = scmp.le.s32.totalorder 1, %s16
      %p119 = scmp.lt.s32.totalorder %s16, 5
      %p120 = pnand %p118, %p119
      %p121 = pneg %p120
      // Predicated region
      $region9: #{tpu_custom_call.1} parent=5 // pred_check
        _
      $region10: #{tpu_custom_call.1} parent=5 // pred_check_branch
        %123 = sbr.rel (%p120) target = $region12
      $region11: #{tpu_custom_call.1} parent=5 // pred_region
        %s124 = ssub.s32 %s16, 1
        // Predicated region
        $region13: #{tpu_custom_call.1} parent=11 // pred_check
          %p125 = pneg %p63
        $region14: #{tpu_custom_call.1} parent=11 // pred_check_branch
          %127 = sbr.rel (%p125) target = $region16
        $region15: #{tpu_custom_call.1} parent=11 // pred_region
          %s129 = ssub.s32 1792, 1792
          %130 = vsyncadd [#allocation6], %s129
          %s131 = sshll.u32 [#allocation5], 4
          %s132 = int_to_ptr.vmem [resolvable:$true] %s131
          %137 = dma.hbm_to_vmem [thread:$0]  %s1, 1792, %s132, [#allocation6], 128, 128, 8
        $region16: #{tpu_custom_call.1} parent=11 // pred_fallthru
          _
        // Predicated region
        $region17: #{tpu_custom_call.1} parent=11 // pred_check
          %p138 = pneg %p84
        $region18: #{tpu_custom_call.1} parent=11 // pred_check_branch
          %140 = sbr.rel (%p138) target = $region20
        $region19: #{tpu_custom_call.1} parent=11 // pred_region
          _
        $region20: #{tpu_custom_call.1} parent=11 // pred_fallthru
          _
      $region12: #{tpu_custom_call.1} parent=5 // pred_fallthru
        _
      %p141 = scmp.lt.s32.totalorder %s16, 4
      // Predicated region
      $region21: #{tpu_custom_call.1} parent=5 // pred_check
        %p142 = pneg %p141
      $region22: #{tpu_custom_call.1} parent=5 // pred_check_branch
        %144 = sbr.rel (%p142) target = $region24
      $region23: #{tpu_custom_call.1} parent=5 // pred_region
        // Predicated region
        $region25: #{tpu_custom_call.1} parent=23 // pred_check
          %p145 = pneg %p36
        $region26: #{tpu_custom_call.1} parent=23 // pred_check_branch
          %147 = sbr.rel (%p145) target = $region28
        $region27: #{tpu_custom_call.1} parent=23 // pred_region
          %s148 = sand.u32 %s26, 1
          %s149 = scalar_lea.sflag [#allocation3], %s148
          %s150 = sand.u32 %s26, 1
          %s151 = smul.addr %s150, 1536
          %s152 = scalar_lea.vmem [#allocation2], %s151
          %s154 = ssub.s32 24576, 24576
          %155 = vsyncadd %s149, %s154
          %s156 = smul.addr %s16, 192
          %s157 = smul.addr %s156, 128
          %s158 = scalar_lea.hbm %s0, %s157
          %s159 = sshll.u32 %s152, 4
          %s160 = int_to_ptr.vmem [resolvable:$true] %s159
          %165 = dma.hbm_to_vmem [thread:$0]  %s158, 24576, %s160, %s149, 256, 256, 16
        $region28: #{tpu_custom_call.1} parent=23 // pred_fallthru
          _
      $region24: #{tpu_custom_call.1} parent=5 // pred_fallthru
        _
      %p166 = scmp.le.s32.totalorder 1, %s16
      %p167 = scmp.lt.s32.totalorder %s16, 5
      %p168 = pnand %p166, %p167
      %p169 = pneg %p168
      // Predicated region
      $region29: #{tpu_custom_call.1} parent=5 // pred_check
        _
      $region30: #{tpu_custom_call.1} parent=5 // pred_check_branch
        %171 = sbr.rel (%p168) target = $region32
      $region31: #{tpu_custom_call.1} parent=5 // pred_region
        %s172 = ssub.s32 %s16, 1
        %s173 = sand.u32 %s29, 1
        %s174 = scalar_lea.sflag [#allocation3], %s173
        %s175 = sand.u32 %s29, 1
        %s176 = smul.addr %s175, 1536
        %s177 = scalar_lea.vmem [#allocation2], %s176
        // Predicated region
        $region33: #{tpu_custom_call.1} parent=31 // pred_check
          %p178 = pneg %p42
        $region34: #{tpu_custom_call.1} parent=31 // pred_check_branch
          %180 = sbr.rel (%p178) target = $region36
        $region35: #{tpu_custom_call.1} parent=31 // pred_region
          %181 = dma.done %s174, 24576
        $region36: #{tpu_custom_call.1} parent=31 // pred_fallthru
          _
        // Predicated region
        $region37: #{tpu_custom_call.1} parent=31 // pred_check
          %p182 = pneg %p63
        $region38: #{tpu_custom_call.1} parent=31 // pred_check_branch
          %184 = sbr.rel (%p182) target = $region40
        $region39: #{tpu_custom_call.1} parent=31 // pred_region
          %185 = dma.done [#allocation6], 1792
        $region40: #{tpu_custom_call.1} parent=31 // pred_fallthru
          _
        %s186 = sand.u32 %s29, 1
        %s187 = scalar_lea.sflag [#allocation3], %s186
        %s188 = sand.u32 %s29, 1
        %s189 = smul.addr %s188, 1536
        %s190 = scalar_lea.vmem [#allocation2], %s189
        %p191 = pneg %p42
        %p192 = pneg %p39
        %p193 = pneg %p63
        %p194 = pneg %p60
        %p195 = pneg %p84
        %p196 = pneg %p81
        %p197 = pneg %p110
        %p198 = pneg %p107
        %s199 = sand.u32 %s97, 1
        %s200 = scalar_lea.sflag [#allocation4], %s199
        %s201 = sand.u32 %s97, 1
        %s202 = smul.addr %s201, 168
        %s203 = scalar_lea.vmem [#allocation7], %s202
        %v205 = vld [vmem:[%s177] sm:$0xff]
        %v206 = vld [vmem:[%s177 + $0x8] sm:$0xff]
        %v207 = vld [vmem:[%s177 + $0x10] sm:$0xff]
        %v208 = vld [vmem:[%s177 + $0x18] sm:$0xff]
        %v209 = vld [vmem:[%s177 + $0x20] sm:$0xff]
        %v210 = vld [vmem:[%s177 + $0x28] sm:$0xff]
        %v211 = vld [vmem:[%s177 + $0x30] sm:$0xff]
        %v212 = vld [vmem:[%s177 + $0x38] sm:$0xff]
        %v213 = vld [vmem:[%s177 + $0x40] sm:$0xff]
        %v214 = vld [vmem:[%s177 + $0x48] sm:$0xff]
        %v215 = vld [vmem:[%s177 + $0x50] sm:$0xff]
        %v216 = vld [vmem:[%s177 + $0x58] sm:$0xff]
        %v217 = vld [vmem:[%s177 + $0x60] sm:$0xff]
        %v218 = vld [vmem:[%s177 + $0x68] sm:$0xff]
        %v219 = vld [vmem:[%s177 + $0x70] sm:$0xff]
        %v220 = vld [vmem:[%s177 + $0x78] sm:$0xff]
        %v221 = vld [vmem:[%s177 + $0x80] sm:$0xff]
        %v222 = vld [vmem:[%s177 + $0x88] sm:$0xff]
        %v223 = vld [vmem:[%s177 + $0x90] sm:$0xff]
        %v224 = vld [vmem:[%s177 + $0x98] sm:$0xff]
        %v225 = vld [vmem:[%s177 + $0xa0] sm:$0xff]
        %v226 = vld [vmem:[%s177 + $0xa8] sm:$0xff]
        %v227 = vld [vmem:[%s177 + $0xb0] sm:$0xff]
        %v228 = vld [vmem:[%s177 + $0xb8] sm:$0xff]
        %v229 = vld [vmem:[%s177 + $0xc0] sm:$0xff]
        %v230 = vld [vmem:[%s177 + $0xc8] sm:$0xff]
        %v231 = vld [vmem:[%s177 + $0xd0] sm:$0xff]
        %v232 = vld [vmem:[%s177 + $0xd8] sm:$0xff]
        %v233 = vld [vmem:[%s177 + $0xe0] sm:$0xff]
        %v234 = vld [vmem:[%s177 + $0xe8] sm:$0xff]
        %v235 = vld [vmem:[%s177 + $0xf0] sm:$0xff]
        %v236 = vld [vmem:[%s177 + $0xf8] sm:$0xff]
        %v237 = vld [vmem:[%s177 + $0x100] sm:$0xff]
        %v238 = vld [vmem:[%s177 + $0x108] sm:$0xff]
        %v239 = vld [vmem:[%s177 + $0x110] sm:$0xff]
        %v240 = vld [vmem:[%s177 + $0x118] sm:$0xff]
        %v241 = vld [vmem:[%s177 + $0x120] sm:$0xff]
        %v242 = vld [vmem:[%s177 + $0x128] sm:$0xff]
        %v243 = vld [vmem:[%s177 + $0x130] sm:$0xff]
        %v244 = vld [vmem:[%s177 + $0x138] sm:$0xff]
        %v245 = vld [vmem:[%s177 + $0x140] sm:$0xff]
        %v246 = vld [vmem:[%s177 + $0x148] sm:$0xff]
        %v247 = vld [vmem:[%s177 + $0x150] sm:$0xff]
        %v248 = vld [vmem:[%s177 + $0x158] sm:$0xff]
        %v249 = vld [vmem:[%s177 + $0x160] sm:$0xff]
        %v250 = vld [vmem:[%s177 + $0x168] sm:$0xff]
        %v251 = vld [vmem:[%s177 + $0x170] sm:$0xff]
        %v252 = vld [vmem:[%s177 + $0x178] sm:$0xff]
        %v253 = vld [vmem:[%s177 + $0x180] sm:$0xff]
        %v254 = vld [vmem:[%s177 + $0x188] sm:$0xff]
        %v255 = vld [vmem:[%s177 + $0x190] sm:$0xff]
        %v256 = vld [vmem:[%s177 + $0x198] sm:$0xff]
        %v257 = vld [vmem:[%s177 + $0x1a0] sm:$0xff]
        %v258 = vld [vmem:[%s177 + $0x1a8] sm:$0xff]
        %v259 = vld [vmem:[%s177 + $0x1b0] sm:$0xff]
        %v260 = vld [vmem:[%s177 + $0x1b8] sm:$0xff]
        %v261 = vld [vmem:[%s177 + $0x1c0] sm:$0xff]
        %v262 = vld [vmem:[%s177 + $0x1c8] sm:$0xff]
        %v263 = vld [vmem:[%s177 + $0x1d0] sm:$0xff]
        %v264 = vld [vmem:[%s177 + $0x1d8] sm:$0xff]
        %v265 = vld [vmem:[%s177 + $0x1e0] sm:$0xff]
        %v266 = vld [vmem:[%s177 + $0x1e8] sm:$0xff]
        %v267 = vld [vmem:[%s177 + $0x1f0] sm:$0xff]
        %v268 = vld [vmem:[%s177 + $0x1f8] sm:$0xff]
        %v269 = vld [vmem:[%s177 + $0x200] sm:$0xff]
        %v270 = vld [vmem:[%s177 + $0x208] sm:$0xff]
        %v271 = vld [vmem:[%s177 + $0x210] sm:$0xff]
        %v272 = vld [vmem:[%s177 + $0x218] sm:$0xff]
        %v273 = vld [vmem:[%s177 + $0x220] sm:$0xff]
        %v274 = vld [vmem:[%s177 + $0x228] sm:$0xff]
        %v275 = vld [vmem:[%s177 + $0x230] sm:$0xff]
        %v276 = vld [vmem:[%s177 + $0x238] sm:$0xff]
        %v277 = vld [vmem:[%s177 + $0x240] sm:$0xff]
        %v278 = vld [vmem:[%s177 + $0x248] sm:$0xff]
        %v279 = vld [vmem:[%s177 + $0x250] sm:$0xff]
        %v280 = vld [vmem:[%s177 + $0x258] sm:$0xff]
        %v281 = vld [vmem:[%s177 + $0x260] sm:$0xff]
        %v282 = vld [vmem:[%s177 + $0x268] sm:$0xff]
        %v283 = vld [vmem:[%s177 + $0x270] sm:$0xff]
        %v284 = vld [vmem:[%s177 + $0x278] sm:$0xff]
        %v285 = vld [vmem:[%s177 + $0x280] sm:$0xff]
        %v286 = vld [vmem:[%s177 + $0x288] sm:$0xff]
        %v287 = vld [vmem:[%s177 + $0x290] sm:$0xff]
        %v288 = vld [vmem:[%s177 + $0x298] sm:$0xff]
        %v289 = vld [vmem:[%s177 + $0x2a0] sm:$0xff]
        %v290 = vld [vmem:[%s177 + $0x2a8] sm:$0xff]
        %v291 = vld [vmem:[%s177 + $0x2b0] sm:$0xff]
        %v292 = vld [vmem:[%s177 + $0x2b8] sm:$0xff]
        %v293 = vld [vmem:[%s177 + $0x2c0] sm:$0xff]
        %v294 = vld [vmem:[%s177 + $0x2c8] sm:$0xff]
        %v295 = vld [vmem:[%s177 + $0x2d0] sm:$0xff]
        %v296 = vld [vmem:[%s177 + $0x2d8] sm:$0xff]
        %v297 = vld [vmem:[%s177 + $0x2e0] sm:$0xff]
        %v298 = vld [vmem:[%s177 + $0x2e8] sm:$0xff]
        %v299 = vld [vmem:[%s177 + $0x2f0] sm:$0xff]
        %v300 = vld [vmem:[%s177 + $0x2f8] sm:$0xff]
        %v301 = vld [vmem:[%s177 + $0x300] sm:$0xff]
        %v302 = vld [vmem:[%s177 + $0x308] sm:$0xff]
        %v303 = vld [vmem:[%s177 + $0x310] sm:$0xff]
        %v304 = vld [vmem:[%s177 + $0x318] sm:$0xff]
        %v305 = vld [vmem:[%s177 + $0x320] sm:$0xff]
        %v306 = vld [vmem:[%s177 + $0x328] sm:$0xff]
        %v307 = vld [vmem:[%s177 + $0x330] sm:$0xff]
        %v308 = vld [vmem:[%s177 + $0x338] sm:$0xff]
        %v309 = vld [vmem:[%s177 + $0x340] sm:$0xff]
        %v310 = vld [vmem:[%s177 + $0x348] sm:$0xff]
        %v311 = vld [vmem:[%s177 + $0x350] sm:$0xff]
        %v312 = vld [vmem:[%s177 + $0x358] sm:$0xff]
        %v313 = vld [vmem:[%s177 + $0x360] sm:$0xff]
        %v314 = vld [vmem:[%s177 + $0x368] sm:$0xff]
        %v315 = vld [vmem:[%s177 + $0x370] sm:$0xff]
        %v316 = vld [vmem:[%s177 + $0x378] sm:$0xff]
        %v317 = vld [vmem:[%s177 + $0x380] sm:$0xff]
        %v318 = vld [vmem:[%s177 + $0x388] sm:$0xff]
        %v319 = vld [vmem:[%s177 + $0x390] sm:$0xff]
        %v320 = vld [vmem:[%s177 + $0x398] sm:$0xff]
        %v321 = vld [vmem:[%s177 + $0x3a0] sm:$0xff]
        %v322 = vld [vmem:[%s177 + $0x3a8] sm:$0xff]
        %v323 = vld [vmem:[%s177 + $0x3b0] sm:$0xff]
        %v324 = vld [vmem:[%s177 + $0x3b8] sm:$0xff]
        %v325 = vld [vmem:[%s177 + $0x3c0] sm:$0xff]
        %v326 = vld [vmem:[%s177 + $0x3c8] sm:$0xff]
        %v327 = vld [vmem:[%s177 + $0x3d0] sm:$0xff]
        %v328 = vld [vmem:[%s177 + $0x3d8] sm:$0xff]
        %v329 = vld [vmem:[%s177 + $0x3e0] sm:$0xff]
        %v330 = vld [vmem:[%s177 + $0x3e8] sm:$0xff]
        %v331 = vld [vmem:[%s177 + $0x3f0] sm:$0xff]
        %v332 = vld [vmem:[%s177 + $0x3f8] sm:$0xff]
        %v333 = vld [vmem:[%s177 + $0x400] sm:$0xff]
        %v334 = vld [vmem:[%s177 + $0x408] sm:$0xff]
        %v335 = vld [vmem:[%s177 + $0x410] sm:$0xff]
        %v336 = vld [vmem:[%s177 + $0x418] sm:$0xff]
        %v337 = vld [vmem:[%s177 + $0x420] sm:$0xff]
        %v338 = vld [vmem:[%s177 + $0x428] sm:$0xff]
        %v339 = vld [vmem:[%s177 + $0x430] sm:$0xff]
        %v340 = vld [vmem:[%s177 + $0x438] sm:$0xff]
        %v341 = vld [vmem:[%s177 + $0x440] sm:$0xff]
        %v342 = vld [vmem:[%s177 + $0x448] sm:$0xff]
        %v343 = vld [vmem:[%s177 + $0x450] sm:$0xff]
        %v344 = vld [vmem:[%s177 + $0x458] sm:$0xff]
        %v345 = vld [vmem:[%s177 + $0x460] sm:$0xff]
        %v346 = vld [vmem:[%s177 + $0x468] sm:$0xff]
        %v347 = vld [vmem:[%s177 + $0x470] sm:$0xff]
        %v348 = vld [vmem:[%s177 + $0x478] sm:$0xff]
        %v349 = vld [vmem:[%s177 + $0x480] sm:$0xff]
        %v350 = vld [vmem:[%s177 + $0x488] sm:$0xff]
        %v351 = vld [vmem:[%s177 + $0x490] sm:$0xff]
        %v352 = vld [vmem:[%s177 + $0x498] sm:$0xff]
        %v353 = vld [vmem:[%s177 + $0x4a0] sm:$0xff]
        %v354 = vld [vmem:[%s177 + $0x4a8] sm:$0xff]
        %v355 = vld [vmem:[%s177 + $0x4b0] sm:$0xff]
        %v356 = vld [vmem:[%s177 + $0x4b8] sm:$0xff]
        %v357 = vld [vmem:[%s177 + $0x4c0] sm:$0xff]
        %v358 = vld [vmem:[%s177 + $0x4c8] sm:$0xff]
        %v359 = vld [vmem:[%s177 + $0x4d0] sm:$0xff]
        %v360 = vld [vmem:[%s177 + $0x4d8] sm:$0xff]
        %v361 = vld [vmem:[%s177 + $0x4e0] sm:$0xff]
        %v362 = vld [vmem:[%s177 + $0x4e8] sm:$0xff]
        %v363 = vld [vmem:[%s177 + $0x4f0] sm:$0xff]
        %v364 = vld [vmem:[%s177 + $0x4f8] sm:$0xff]
        %v365 = vld [vmem:[%s177 + $0x500] sm:$0xff]
        %v366 = vld [vmem:[%s177 + $0x508] sm:$0xff]
        %v367 = vld [vmem:[%s177 + $0x510] sm:$0xff]
        %v368 = vld [vmem:[%s177 + $0x518] sm:$0xff]
        %v369 = vld [vmem:[%s177 + $0x520] sm:$0xff]
        %v370 = vld [vmem:[%s177 + $0x528] sm:$0xff]
        %v371 = vld [vmem:[%s177 + $0x530] sm:$0xff]
        %v372 = vld [vmem:[%s177 + $0x538] sm:$0xff]
        %v373 = vld [vmem:[%s177 + $0x540] sm:$0xff]
        %v374 = vld [vmem:[%s177 + $0x548] sm:$0xff]
        %v375 = vld [vmem:[%s177 + $0x550] sm:$0xff]
        %v376 = vld [vmem:[%s177 + $0x558] sm:$0xff]
        %v377 = vld [vmem:[%s177 + $0x560] sm:$0xff]
        %v378 = vld [vmem:[%s177 + $0x568] sm:$0xff]
        %v379 = vld [vmem:[%s177 + $0x570] sm:$0xff]
        %v380 = vld [vmem:[%s177 + $0x578] sm:$0xff]
        %v381 = vld [vmem:[%s177 + $0x580] sm:$0xff]
        %v382 = vld [vmem:[%s177 + $0x588] sm:$0xff]
        %v383 = vld [vmem:[%s177 + $0x590] sm:$0xff]
        %v384 = vld [vmem:[%s177 + $0x598] sm:$0xff]
        %v385 = vld [vmem:[%s177 + $0x5a0] sm:$0xff]
        %v386 = vld [vmem:[%s177 + $0x5a8] sm:$0xff]
        %v387 = vld [vmem:[%s177 + $0x5b0] sm:$0xff]
        %v388 = vld [vmem:[%s177 + $0x5b8] sm:$0xff]
        %v389 = vld [vmem:[%s177 + $0x5c0] sm:$0xff]
        %v390 = vld [vmem:[%s177 + $0x5c8] sm:$0xff]
        %v391 = vld [vmem:[%s177 + $0x5d0] sm:$0xff]
        %v392 = vld [vmem:[%s177 + $0x5d8] sm:$0xff]
        %v393 = vld [vmem:[%s177 + $0x5e0] sm:$0xff]
        %v394 = vld [vmem:[%s177 + $0x5e8] sm:$0xff]
        %v395 = vld [vmem:[%s177 + $0x5f0] sm:$0xff]
        %v396 = vld [vmem:[%s177 + $0x5f8] sm:$0xff]
        %v397 = vpack.c.bf16 %v207, %v205
        %v398 = vpack.c.bf16 %v208, %v206
        %v399 = vpack.c.bf16 %v211, %v209
        %v400 = vpack.c.bf16 %v212, %v210
        %v401 = vpack.c.bf16 %v215, %v213
        %v402 = vpack.c.bf16 %v216, %v214
        %v403 = vpack.c.bf16 %v219, %v217
        %v404 = vpack.c.bf16 %v220, %v218
        %v405 = vpack.c.bf16 %v223, %v221
        %v406 = vpack.c.bf16 %v224, %v222
        %v407 = vpack.c.bf16 %v227, %v225
        %v408 = vpack.c.bf16 %v228, %v226
        %v409 = vpack.c.bf16 %v231, %v229
        %v410 = vpack.c.bf16 %v232, %v230
        %v411 = vpack.c.bf16 %v235, %v233
        %v412 = vpack.c.bf16 %v236, %v234
        %v413 = vpack.c.bf16 %v239, %v237
        %v414 = vpack.c.bf16 %v240, %v238
        %v415 = vpack.c.bf16 %v243, %v241
        %v416 = vpack.c.bf16 %v244, %v242
        %v417 = vpack.c.bf16 %v247, %v245
        %v418 = vpack.c.bf16 %v248, %v246
        %v419 = vpack.c.bf16 %v251, %v249
        %v420 = vpack.c.bf16 %v252, %v250
        %v421 = vpack.c.bf16 %v255, %v253
        %v422 = vpack.c.bf16 %v256, %v254
        %v423 = vpack.c.bf16 %v259, %v257
        %v424 = vpack.c.bf16 %v260, %v258
        %v425 = vpack.c.bf16 %v263, %v261
        %v426 = vpack.c.bf16 %v264, %v262
        %v427 = vpack.c.bf16 %v267, %v265
        %v428 = vpack.c.bf16 %v268, %v266
        %v429 = vpack.c.bf16 %v271, %v269
        %v430 = vpack.c.bf16 %v272, %v270
        %v431 = vpack.c.bf16 %v275, %v273
        %v432 = vpack.c.bf16 %v276, %v274
        %v433 = vpack.c.bf16 %v279, %v277
        %v434 = vpack.c.bf16 %v280, %v278
        %v435 = vpack.c.bf16 %v283, %v281
        %v436 = vpack.c.bf16 %v284, %v282
        %v437 = vpack.c.bf16 %v287, %v285
        %v438 = vpack.c.bf16 %v288, %v286
        %v439 = vpack.c.bf16 %v291, %v289
        %v440 = vpack.c.bf16 %v292, %v290
        %v441 = vpack.c.bf16 %v295, %v293
        %v442 = vpack.c.bf16 %v296, %v294
        %v443 = vpack.c.bf16 %v299, %v297
        %v444 = vpack.c.bf16 %v300, %v298
        %v445 = vpack.c.bf16 %v303, %v301
        %v446 = vpack.c.bf16 %v304, %v302
        %v447 = vpack.c.bf16 %v307, %v305
        %v448 = vpack.c.bf16 %v308, %v306
        %v449 = vpack.c.bf16 %v311, %v309
        %v450 = vpack.c.bf16 %v312, %v310
        %v451 = vpack.c.bf16 %v315, %v313
        %v452 = vpack.c.bf16 %v316, %v314
        %v453 = vpack.c.bf16 %v319, %v317
        %v454 = vpack.c.bf16 %v320, %v318
        %v455 = vpack.c.bf16 %v323, %v321
        %v456 = vpack.c.bf16 %v324, %v322
        %v457 = vpack.c.bf16 %v327, %v325
        %v458 = vpack.c.bf16 %v328, %v326
        %v459 = vpack.c.bf16 %v331, %v329
        %v460 = vpack.c.bf16 %v332, %v330
        %v461 = vpack.c.bf16 %v335, %v333
        %v462 = vpack.c.bf16 %v336, %v334
        %v463 = vpack.c.bf16 %v339, %v337
        %v464 = vpack.c.bf16 %v340, %v338
        %v465 = vpack.c.bf16 %v343, %v341
        %v466 = vpack.c.bf16 %v344, %v342
        %v467 = vpack.c.bf16 %v347, %v345
        %v468 = vpack.c.bf16 %v348, %v346
        %v469 = vpack.c.bf16 %v351, %v349
        %v470 = vpack.c.bf16 %v352, %v350
        %v471 = vpack.c.bf16 %v355, %v353
        %v472 = vpack.c.bf16 %v356, %v354
        %v473 = vpack.c.bf16 %v359, %v357
        %v474 = vpack.c.bf16 %v360, %v358
        %v475 = vpack.c.bf16 %v363, %v361
        %v476 = vpack.c.bf16 %v364, %v362
        %v477 = vpack.c.bf16 %v367, %v365
        %v478 = vpack.c.bf16 %v368, %v366
        %v479 = vpack.c.bf16 %v371, %v369
        %v480 = vpack.c.bf16 %v372, %v370
        %v481 = vpack.c.bf16 %v375, %v373
        %v482 = vpack.c.bf16 %v376, %v374
        %v483 = vpack.c.bf16 %v379, %v377
        %v484 = vpack.c.bf16 %v380, %v378
        %v485 = vpack.c.bf16 %v383, %v381
        %v486 = vpack.c.bf16 %v384, %v382
        %v487 = vpack.c.bf16 %v387, %v385
        %v488 = vpack.c.bf16 %v388, %v386
        %v489 = vpack.c.bf16 %v391, %v389
        %v490 = vpack.c.bf16 %v392, %v390
        %v491 = vpack.c.bf16 %v395, %v393
        %v492 = vpack.c.bf16 %v396, %v394
        %v493 = vld [vmem:[%s2] sm:$0xf]
        %v494 = vld [vmem:[%s2 + $0x4] sm:$0xf]
        %v495 = vld [vmem:[%s2 + $0x8] sm:$0xf]
        %v496 = vld [vmem:[%s2 + $0xc] sm:$0xf]
        %v497 = vld [vmem:[%s2 + $0x10] sm:$0xf]
        %v498 = vld [vmem:[%s2 + $0x14] sm:$0xf]
        %v499 = vld [vmem:[%s2 + $0x18] sm:$0xf]
        %v500 = vld [vmem:[%s2 + $0x1c] sm:$0xf]
        %v501 = vld [vmem:[%s2 + $0x20] sm:$0xf]
        %v502 = vld [vmem:[%s2 + $0x24] sm:$0xf]
        %v503 = vld [vmem:[%s2 + $0x28] sm:$0xf]
        %v504 = vld [vmem:[%s2 + $0x2c] sm:$0xf]
        %v505 = vld [vmem:[%s2 + $0x30] sm:$0xf]
        %v506 = vld [vmem:[%s2 + $0x34] sm:$0xf]
        %v507 = vld [vmem:[%s2 + $0x38] sm:$0xf]
        %v508 = vld [vmem:[%s2 + $0x3c] sm:$0xf]
        %v509 = vld [vmem:[%s2 + $0x40] sm:$0xf]
        %v510 = vld [vmem:[%s2 + $0x44] sm:$0xf]
        %v511 = vld [vmem:[%s2 + $0x48] sm:$0xf]
        %v512 = vld [vmem:[%s2 + $0x4c] sm:$0xf]
        %v513 = vld [vmem:[%s2 + $0x50] sm:$0xf]
        %v514 = vld [vmem:[%s2 + $0x54] sm:$0xf]
        %v515 = vld [vmem:[%s2 + $0x58] sm:$0xf]
        %v516 = vld [vmem:[%s2 + $0x5c] sm:$0xf]
        %v517 = vld [vmem:[%s2 + $0x60] sm:$0xf]
        %v518 = vld [vmem:[%s2 + $0x64] sm:$0xf]
        %v519 = vld [vmem:[%s2 + $0x68] sm:$0xf]
        %v520 = vld [vmem:[%s2 + $0x6c] sm:$0xf]
        %v521 = vld [vmem:[%s2 + $0x70] sm:$0xf]
        %v522 = vld [vmem:[%s2 + $0x74] sm:$0xf]
        %v523 = vld [vmem:[%s2 + $0x78] sm:$0xf]
        %v524 = vld [vmem:[%s2 + $0x7c] sm:$0xf]
        %v557 = vunpack.c.l.b16 %v493
        %v558 = vunpack.c.l.b16 %v494
        %v559 = vunpack.c.l.b16 %v495
        %v560 = vunpack.c.l.b16 %v496
        %v561 = vunpack.c.l.b16 %v497
        %v562 = vunpack.c.l.b16 %v498
        %v563 = vunpack.c.l.b16 %v499
        %v564 = vunpack.c.l.b16 %v500
        %v565 = vunpack.c.l.b16 %v501
        %v566 = vunpack.c.l.b16 %v502
        %v567 = vunpack.c.l.b16 %v503
        %v568 = vunpack.c.l.b16 %v504
        %v569 = vunpack.c.l.b16 %v505
        %v570 = vunpack.c.l.b16 %v506
        %v571 = vunpack.c.l.b16 %v507
        %v572 = vunpack.c.l.b16 %v508
        %v573 = vunpack.c.l.b16 %v509
        %v574 = vunpack.c.l.b16 %v510
        %v575 = vunpack.c.l.b16 %v511
        %v576 = vunpack.c.l.b16 %v512
        %v577 = vunpack.c.l.b16 %v513
        %v578 = vunpack.c.l.b16 %v514
        %v579 = vunpack.c.l.b16 %v515
        %v580 = vunpack.c.l.b16 %v516
        %v581 = vunpack.c.l.b16 %v517
        %v582 = vunpack.c.l.b16 %v518
        %v583 = vunpack.c.l.b16 %v519
        %v584 = vunpack.c.l.b16 %v520
        %v585 = vunpack.c.l.b16 %v521
        %v586 = vunpack.c.l.b16 %v522
        %v587 = vunpack.c.l.b16 %v523
        %v588 = vunpack.c.l.b16 %v524
        %v589 = vpack.c.b16 %v558, %v557
        %v590 = vpack.c.b16 %v560, %v559
        %v591 = vpack.c.b16 %v562, %v561
        %v592 = vpack.c.b16 %v564, %v563
        %v593 = vpack.c.b16 %v566, %v565
        %v594 = vpack.c.b16 %v568, %v567
        %v595 = vpack.c.b16 %v570, %v569
        %v596 = vpack.c.b16 %v572, %v571
        %v597 = vpack.c.b16 %v574, %v573
        %v598 = vpack.c.b16 %v576, %v575
        %v599 = vpack.c.b16 %v578, %v577
        %v600 = vpack.c.b16 %v580, %v579
        %v601 = vpack.c.b16 %v582, %v581
        %v602 = vpack.c.b16 %v584, %v583
        %v603 = vpack.c.b16 %v586, %v585
        %v604 = vpack.c.b16 %v588, %v587
        %621 = vmatprep.subr.bf16.mxu0 0
        %622 = vmatpush1.bf16.msra.mxu0 %v589
        %623 = vmatprep.subr.bf16.mxu0 0
        %624 = vmatpush1.bf16.msra.mxu0 %v590
        %625 = vmatprep.subr.bf16.mxu0 0
        %626 = vmatpush1.bf16.msra.mxu0 %v591
        %627 = vmatprep.subr.bf16.mxu0 0
        %628 = vmatpush1.bf16.msra.mxu0 %v592
        %629 = vmatprep.subr.bf16.mxu0 0
        %630 = vmatpush1.bf16.msra.mxu0 %v593
        %631 = vmatprep.subr.bf16.mxu0 0
        %632 = vmatpush1.bf16.msra.mxu0 %v594
        %633 = vmatprep.subr.bf16.mxu0 0
        %634 = vmatpush1.bf16.msra.mxu0 %v595
        %635 = vmatprep.subr.bf16.mxu0 0
        %636 = vmatpush1.bf16.msra.mxu0 %v596
        %637 = vmatprep.subr.bf16.mxu0 0
        %638 = vmatpush1.bf16.msra.mxu0 %v597
        %639 = vmatprep.subr.bf16.mxu0 0
        %640 = vmatpush1.bf16.msra.mxu0 %v598
        %641 = vmatprep.subr.bf16.mxu0 0
        %642 = vmatpush1.bf16.msra.mxu0 %v599
        %643 = vmatprep.subr.bf16.mxu0 0
        %644 = vmatpush1.bf16.msra.mxu0 %v600
        %645 = vmatprep.subr.bf16.mxu0 0
        %646 = vmatpush1.bf16.msra.mxu0 %v601
        %647 = vmatprep.subr.bf16.mxu0 0
        %648 = vmatpush1.bf16.msra.mxu0 %v602
        %649 = vmatprep.subr.bf16.mxu0 0
        %650 = vmatpush1.bf16.msra.mxu0 %v603
        %651 = vmatprep.subr.bf16.mxu0 0
        %652 = vmatpush1.bf16.msra.mxu0 %v604
        %653 = vmatprep.mubr.bf16.mxu0 %v398
        %654 = vmatmul.mubr.bf16.gmra.mrb[0].mxu0 %v397
        %v655 = vpop.f32.mrb[0].mxu0
        %v656 = vadd.f32 0.0, %v655
        %v657 = vpop.f32.mrb[0].mxu0
        %v658 = vpop.f32.mrb[0].mxu0
        %v659 = vadd.f32 0.0, %v658
        %v660 = vpop.f32.mrb[0].mxu0
        %661 = vmatprep.mubr.bf16.mxu0 %v400
        %662 = vmatmul.mubr.bf16.gmra.mrb[0].mxu0 %v399
        %v663 = vpop.f32.mrb[0].mxu0
        %v664 = vadd.f32 0.0, %v663
        %v665 = vpop.f32.mrb[0].mxu0
        %v666 = vpop.f32.mrb[0].mxu0
        %v667 = vadd.f32 0.0, %v666
        %v668 = vpop.f32.mrb[0].mxu0
        %669 = vmatprep.mubr.bf16.mxu0 %v402
        %670 = vmatmul.mubr.bf16.gmra.mrb[0].mxu0 %v401
        %v671 = vpop.f32.mrb[0].mxu0
        %v672 = vadd.f32 0.0, %v671
        %v673 = vpop.f32.mrb[0].mxu0
        %v674 = vpop.f32.mrb[0].mxu0
        %v675 = vadd.f32 0.0, %v674
        %v676 = vpop.f32.mrb[0].mxu0
        %677 = vmatprep.mubr.bf16.mxu0 %v404
        %678 = vmatmul.mubr.bf16.gmra.mrb[0].mxu0 %v403
        %v679 = vpop.f32.mrb[0].mxu0
        %v680 = vadd.f32 0.0, %v679
        %v681 = vpop.f32.mrb[0].mxu0
        %v682 = vpop.f32.mrb[0].mxu0
        %v683 = vadd.f32 0.0, %v682
        %v684 = vpop.f32.mrb[0].mxu0
        %685 = vmatprep.mubr.bf16.mxu0 %v406
        %686 = vmatmul.mubr.bf16.gmra.mrb[0].mxu0 %v405
        %v687 = vpop.f32.mrb[0].mxu0
        %v688 = vadd.f32 0.0, %v687
        %v689 = vpop.f32.mrb[0].mxu0
        %v690 = vpop.f32.mrb[0].mxu0
        %v691 = vadd.f32 0.0, %v690
        %v692 = vpop.f32.mrb[0].mxu0
        %693 = vmatprep.mubr.bf16.mxu0 %v408
        %694 = vmatmul.mubr.bf16.gmra.mrb[0].mxu0 %v407
        %v695 = vpop.f32.mrb[0].mxu0
        %v696 = vadd.f32 0.0, %v695
        %v697 = vpop.f32.mrb[0].mxu0
        %v698 = vpop.f32.mrb[0].mxu0
        %v699 = vadd.f32 0.0, %v698
        %v700 = vpop.f32.mrb[0].mxu0
        %701 = vmatprep.mubr.bf16.mxu0 %v410
        %702 = vmatmul.mubr.bf16.gmra.mrb[0].mxu0 %v409
        %v703 = vpop.f32.mrb[0].mxu0
        %v704 = vadd.f32 0.0, %v703
        %v705 = vpop.f32.mrb[0].mxu0
        %v706 = vpop.f32.mrb[0].mxu0
        %v707 = vadd.f32 0.0, %v706
        %v708 = vpop.f32.mrb[0].mxu0
        %709 = vmatprep.mubr.bf16.mxu0 %v412
        %710 = vmatmul.mubr.bf16.gmra.mrb[0].mxu0 %v411
        %v711 = vpop.f32.mrb[0].mxu0
        %v712 = vadd.f32 0.0, %v711
        %v713 = vpop.f32.mrb[0].mxu0
        %v714 = vpop.f32.mrb[0].mxu0
        %v715 = vadd.f32 0.0, %v714
        %v716 = vpop.f32.mrb[0].mxu0
        %717 = vmatprep.mubr.bf16.mxu0 %v414
        %718 = vmatmul.mubr.bf16.gmra.mrb[0].mxu0 %v413
        %v719 = vpop.f32.mrb[0].mxu0
        %v720 = vadd.f32 0.0, %v719
        %v721 = vpop.f32.mrb[0].mxu0
        %v722 = vpop.f32.mrb[0].mxu0
        %v723 = vadd.f32 0.0, %v722
        %v724 = vpop.f32.mrb[0].mxu0
        %725 = vmatprep.mubr.bf16.mxu0 %v416
        %726 = vmatmul.mubr.bf16.gmra.mrb[0].mxu0 %v415
        %v727 = vpop.f32.mrb[0].mxu0
        %v728 = vadd.f32 0.0, %v727
        %v729 = vpop.f32.mrb[0].mxu0
        %v730 = vpop.f32.mrb[0].mxu0
        %v731 = vadd.f32 0.0, %v730
        %v732 = vpop.f32.mrb[0].mxu0
        %733 = vmatprep.mubr.bf16.mxu0 %v418
        %734 = vmatmul.mubr.bf16.gmra.mrb[0].mxu0 %v417
        %v735 = vpop.f32.mrb[0].mxu0
        %v736 = vadd.f32 0.0, %v735
        %v737 = vpop.f32.mrb[0].mxu0
        %v738 = vpop.f32.mrb[0].mxu0
        %v739 = vadd.f32 0.0, %v738
        %v740 = vpop.f32.mrb[0].mxu0
        %741 = vmatprep.mubr.bf16.mxu0 %v420
        %742 = vmatmul.mubr.bf16.gmra.mrb[0].mxu0 %v419
        %v743 = vpop.f32.mrb[0].mxu0
        %v744 = vadd.f32 0.0, %v743
        %v745 = vpop.f32.mrb[0].mxu0
        %v746 = vpop.f32.mrb[0].mxu0
        %v747 = vadd.f32 0.0, %v746
        %v748 = vpop.f32.mrb[0].mxu0
        %749 = vmatprep.mubr.bf16.mxu0 %v422
        %750 = vmatmul.mubr.bf16.gmra.mrb[0].mxu0 %v421
        %v751 = vpop.f32.mrb[0].mxu0
        %v752 = vadd.f32 0.0, %v751
        %v753 = vpop.f32.mrb[0].mxu0
        %v754 = vpop.f32.mrb[0].mxu0
        %v755 = vadd.f32 0.0, %v754
        %v756 = vpop.f32.mrb[0].mxu0
        %757 = vmatprep.mubr.bf16.mxu0 %v424
        %758 = vmatmul.mubr.bf16.gmra.mrb[0].mxu0 %v423
        %v759 = vpop.f32.mrb[0].mxu0
        %v760 = vadd.f32 0.0, %v759
        %v761 = vpop.f32.mrb[0].mxu0
        %v762 = vpop.f32.mrb[0].mxu0
        %v763 = vadd.f32 0.0, %v762
        %v764 = vpop.f32.mrb[0].mxu0
        %765 = vmatprep.mubr.bf16.mxu0 %v426
        %766 = vmatmul.mubr.bf16.gmra.mrb[0].mxu0 %v425
        %v767 = vpop.f32.mrb[0].mxu0
        %v768 = vadd.f32 0.0, %v767
        %v769 = vpop.f32.mrb[0].mxu0
        %v770 = vpop.f32.mrb[0].mxu0
        %v771 = vadd.f32 0.0, %v770
        %v772 = vpop.f32.mrb[0].mxu0
        %773 = vmatprep.mubr.bf16.mxu0 %v428
        %774 = vmatmul.mubr.bf16.gmra.mrb[0].mxu0 %v427
        %v775 = vpop.f32.mrb[0].mxu0
        %v776 = vadd.f32 0.0, %v775
        %v777 = vpop.f32.mrb[0].mxu0
        %v778 = vpop.f32.mrb[0].mxu0
        %v779 = vadd.f32 0.0, %v778
        %v780 = vpop.f32.mrb[0].mxu0
        %781 = vmatprep.mubr.bf16.mxu0 %v430
        %782 = vmatmul.mubr.bf16.gmra.mrb[0].mxu0 %v429
        %v783 = vpop.f32.mrb[0].mxu0
        %v784 = vadd.f32 0.0, %v783
        %v785 = vpop.f32.mrb[0].mxu0
        %v786 = vpop.f32.mrb[0].mxu0
        %v787 = vadd.f32 0.0, %v786
        %v788 = vpop.f32.mrb[0].mxu0
        %789 = vmatprep.mubr.bf16.mxu0 %v432
        %790 = vmatmul.mubr.bf16.gmra.mrb[0].mxu0 %v431
        %v791 = vpop.f32.mrb[0].mxu0
        %v792 = vadd.f32 0.0, %v791
        %v793 = vpop.f32.mrb[0].mxu0
        %v794 = vpop.f32.mrb[0].mxu0
        %v795 = vadd.f32 0.0, %v794
        %v796 = vpop.f32.mrb[0].mxu0
        %797 = vmatprep.mubr.bf16.mxu0 %v434
        %798 = vmatmul.mubr.bf16.gmra.mrb[0].mxu0 %v433
        %v799 = vpop.f32.mrb[0].mxu0
        %v800 = vadd.f32 0.0, %v799
        %v801 = vpop.f32.mrb[0].mxu0
        %v802 = vpop.f32.mrb[0].mxu0
        %v803 = vadd.f32 0.0, %v802
        %v804 = vpop.f32.mrb[0].mxu0
        %805 = vmatprep.mubr.bf16.mxu0 %v436
        %806 = vmatmul.mubr.bf16.gmra.mrb[0].mxu0 %v435
        %v807 = vpop.f32.mrb[0].mxu0
        %v808 = vadd.f32 0.0, %v807
        %v809 = vpop.f32.mrb[0].mxu0
        %v810 = vpop.f32.mrb[0].mxu0
        %v811 = vadd.f32 0.0, %v810
        %v812 = vpop.f32.mrb[0].mxu0
        %813 = vmatprep.mubr.bf16.mxu0 %v438
        %814 = vmatmul.mubr.bf16.gmra.mrb[0].mxu0 %v437
        %v815 = vpop.f32.mrb[0].mxu0
        %v816 = vadd.f32 0.0, %v815
        %v817 = vpop.f32.mrb[0].mxu0
        %v818 = vpop.f32.mrb[0].mxu0
        %v819 = vadd.f32 0.0, %v818
        %v820 = vpop.f32.mrb[0].mxu0
        %821 = vmatprep.mubr.bf16.mxu0 %v440
        %822 = vmatmul.mubr.bf16.gmra.mrb[0].mxu0 %v439
        %v823 = vpop.f32.mrb[0].mxu0
        %v824 = vadd.f32 0.0, %v823
        %v825 = vpop.f32.mrb[0].mxu0
        %v826 = vpop.f32.mrb[0].mxu0
        %v827 = vadd.f32 0.0, %v826
        %v828 = vpop.f32.mrb[0].mxu0
        %829 = vmatprep.mubr.bf16.mxu0 %v442
        %830 = vmatmul.mubr.bf16.gmra.mrb[0].mxu0 %v441
        %v831 = vpop.f32.mrb[0].mxu0
        %v832 = vadd.f32 0.0, %v831
        %v833 = vpop.f32.mrb[0].mxu0
        %v834 = vpop.f32.mrb[0].mxu0
        %v835 = vadd.f32 0.0, %v834
        %v836 = vpop.f32.mrb[0].mxu0
        %837 = vmatprep.mubr.bf16.mxu0 %v444
        %838 = vmatmul.mubr.bf16.gmra.mrb[0].mxu0 %v443
        %v839 = vpop.f32.mrb[0].mxu0
        %v840 = vadd.f32 0.0, %v839
        %v841 = vpop.f32.mrb[0].mxu0
        %v842 = vpop.f32.mrb[0].mxu0
        %v843 = vadd.f32 0.0, %v842
        %v844 = vpop.f32.mrb[0].mxu0
        %845 = vmatprep.mubr.bf16.mxu0 %v446
        %846 = vmatmul.mubr.bf16.gmra.mrb[0].mxu0 %v445
        %v847 = vpop.f32.mrb[0].mxu0
        %v848 = vadd.f32 0.0, %v847
        %v849 = vpop.f32.mrb[0].mxu0
        %v850 = vpop.f32.mrb[0].mxu0
        %v851 = vadd.f32 0.0, %v850
        %v852 = vpop.f32.mrb[0].mxu0
        %853 = vmatprep.mubr.bf16.mxu0 %v448
        %854 = vmatmul.mubr.bf16.gmra.mrb[0].mxu0 %v447
        %v855 = vpop.f32.mrb[0].mxu0
        %v856 = vadd.f32 0.0, %v855
        %v857 = vpop.f32.mrb[0].mxu0
        %v858 = vpop.f32.mrb[0].mxu0
        %v859 = vadd.f32 0.0, %v858
        %v860 = vpop.f32.mrb[0].mxu0
        %861 = vmatprep.mubr.bf16.mxu0 %v450
        %862 = vmatmul.mubr.bf16.gmra.mrb[0].mxu0 %v449
        %v863 = vpop.f32.mrb[0].mxu0
        %v864 = vadd.f32 0.0, %v863
        %v865 = vpop.f32.mrb[0].mxu0
        %v866 = vpop.f32.mrb[0].mxu0
        %v867 = vadd.f32 0.0, %v866
        %v868 = vpop.f32.mrb[0].mxu0
        %869 = vmatprep.mubr.bf16.mxu0 %v452
        %870 = vmatmul.mubr.bf16.gmra.mrb[0].mxu0 %v451
        %v871 = vpop.f32.mrb[0].mxu0
        %v872 = vadd.f32 0.0, %v871
        %v873 = vpop.f32.mrb[0].mxu0
        %v874 = vpop.f32.mrb[0].mxu0
        %v875 = vadd.f32 0.0, %v874
        %v876 = vpop.f32.mrb[0].mxu0
        %877 = vmatprep.mubr.bf16.mxu0 %v454
        %878 = vmatmul.mubr.bf16.gmra.mrb[0].mxu0 %v453
        %v879 = vpop.f32.mrb[0].mxu0
        %v880 = vadd.f32 0.0, %v879
        %v881 = vpop.f32.mrb[0].mxu0
        %v882 = vpop.f32.mrb[0].mxu0
        %v883 = vadd.f32 0.0, %v882
        %v884 = vpop.f32.mrb[0].mxu0
        %885 = vmatprep.mubr.bf16.mxu0 %v456
        %886 = vmatmul.mubr.bf16.gmra.mrb[0].mxu0 %v455
        %v887 = vpop.f32.mrb[0].mxu0
        %v888 = vadd.f32 0.0, %v887
        %v889 = vpop.f32.mrb[0].mxu0
        %v890 = vpop.f32.mrb[0].mxu0
        %v891 = vadd.f32 0.0, %v890
        %v892 = vpop.f32.mrb[0].mxu0
        %893 = vmatprep.mubr.bf16.mxu0 %v458
        %894 = vmatmul.mubr.bf16.gmra.mrb[0].mxu0 %v457
        %v895 = vpop.f32.mrb[0].mxu0
        %v896 = vadd.f32 0.0, %v895
        %v897 = vpop.f32.mrb[0].mxu0
        %v898 = vpop.f32.mrb[0].mxu0
        %v899 = vadd.f32 0.0, %v898
        %v900 = vpop.f32.mrb[0].mxu0
        %901 = vmatprep.mubr.bf16.mxu0 %v460
        %902 = vmatmul.mubr.bf16.gmra.mrb[0].mxu0 %v459
        %v903 = vpop.f32.mrb[0].mxu0
        %v904 = vadd.f32 0.0, %v903
        %v905 = vpop.f32.mrb[0].mxu0
        %v906 = vpop.f32.mrb[0].mxu0
        %v907 = vadd.f32 0.0, %v906
        %v908 = vpop.f32.mrb[0].mxu0
        %909 = vmatprep.mubr.bf16.mxu0 %v462
        %910 = vmatmul.mubr.bf16.gmra.mrb[0].mxu0 %v461
        %v911 = vpop.f32.mrb[0].mxu0
        %v912 = vadd.f32 0.0, %v911
        %v913 = vpop.f32.mrb[0].mxu0
        %v914 = vpop.f32.mrb[0].mxu0
        %v915 = vadd.f32 0.0, %v914
        %v916 = vpop.f32.mrb[0].mxu0
        %917 = vmatprep.mubr.bf16.mxu0 %v464
        %918 = vmatmul.mubr.bf16.gmra.mrb[0].mxu0 %v463
        %v919 = vpop.f32.mrb[0].mxu0
        %v920 = vadd.f32 0.0, %v919
        %v921 = vpop.f32.mrb[0].mxu0
        %v922 = vpop.f32.mrb[0].mxu0
        %v923 = vadd.f32 0.0, %v922
        %v924 = vpop.f32.mrb[0].mxu0
        %925 = vmatprep.mubr.bf16.mxu0 %v466
        %926 = vmatmul.mubr.bf16.gmra.mrb[0].mxu0 %v465
        %v927 = vpop.f32.mrb[0].mxu0
        %v928 = vadd.f32 0.0, %v927
        %v929 = vpop.f32.mrb[0].mxu0
        %v930 = vpop.f32.mrb[0].mxu0
        %v931 = vadd.f32 0.0, %v930
        %v932 = vpop.f32.mrb[0].mxu0
        %933 = vmatprep.mubr.bf16.mxu0 %v468
        %934 = vmatmul.mubr.bf16.gmra.mrb[0].mxu0 %v467
        %v935 = vpop.f32.mrb[0].mxu0
        %v936 = vadd.f32 0.0, %v935
        %v937 = vpop.f32.mrb[0].mxu0
        %v938 = vpop.f32.mrb[0].mxu0
        %v939 = vadd.f32 0.0, %v938
        %v940 = vpop.f32.mrb[0].mxu0
        %941 = vmatprep.mubr.bf16.mxu0 %v470
        %942 = vmatmul.mubr.bf16.gmra.mrb[0].mxu0 %v469
        %v943 = vpop.f32.mrb[0].mxu0
        %v944 = vadd.f32 0.0, %v943
        %v945 = vpop.f32.mrb[0].mxu0
        %v946 = vpop.f32.mrb[0].mxu0
        %v947 = vadd.f32 0.0, %v946
        %v948 = vpop.f32.mrb[0].mxu0
        %949 = vmatprep.mubr.bf16.mxu0 %v472
        %950 = vmatmul.mubr.bf16.gmra.mrb[0].mxu0 %v471
        %v951 = vpop.f32.mrb[0].mxu0
        %v952 = vadd.f32 0.0, %v951
        %v953 = vpop.f32.mrb[0].mxu0
        %v954 = vpop.f32.mrb[0].mxu0
        %v955 = vadd.f32 0.0, %v954
        %v956 = vpop.f32.mrb[0].mxu0
        %957 = vmatprep.mubr.bf16.mxu0 %v474
        %958 = vmatmul.mubr.bf16.gmra.mrb[0].mxu0 %v473
        %v959 = vpop.f32.mrb[0].mxu0
        %v960 = vadd.f32 0.0, %v959
        %v961 = vpop.f32.mrb[0].mxu0
        %v962 = vpop.f32.mrb[0].mxu0
        %v963 = vadd.f32 0.0, %v962
        %v964 = vpop.f32.mrb[0].mxu0
        %965 = vmatprep.mubr.bf16.mxu0 %v476
        %966 = vmatmul.mubr.bf16.gmra.mrb[0].mxu0 %v475
        %v967 = vpop.f32.mrb[0].mxu0
        %v968 = vadd.f32 0.0, %v967
        %v969 = vpop.f32.mrb[0].mxu0
        %v970 = vpop.f32.mrb[0].mxu0
        %v971 = vadd.f32 0.0, %v970
        %v972 = vpop.f32.mrb[0].mxu0
        %973 = vmatprep.mubr.bf16.mxu0 %v478
        %974 = vmatmul.mubr.bf16.gmra.mrb[0].mxu0 %v477
        %v975 = vpop.f32.mrb[0].mxu0
        %v976 = vadd.f32 0.0, %v975
        %v977 = vpop.f32.mrb[0].mxu0
        %v978 = vpop.f32.mrb[0].mxu0
        %v979 = vadd.f32 0.0, %v978
        %v980 = vpop.f32.mrb[0].mxu0
        %981 = vmatprep.mubr.bf16.mxu0 %v480
        %982 = vmatmul.mubr.bf16.gmra.mrb[0].mxu0 %v479
        %v983 = vpop.f32.mrb[0].mxu0
        %v984 = vadd.f32 0.0, %v983
        %v985 = vpop.f32.mrb[0].mxu0
        %v986 = vpop.f32.mrb[0].mxu0
        %v987 = vadd.f32 0.0, %v986
        %v988 = vpop.f32.mrb[0].mxu0
        %989 = vmatprep.mubr.bf16.mxu0 %v482
        %990 = vmatmul.mubr.bf16.gmra.mrb[0].mxu0 %v481
        %v991 = vpop.f32.mrb[0].mxu0
        %v992 = vadd.f32 0.0, %v991
        %v993 = vpop.f32.mrb[0].mxu0
        %v994 = vpop.f32.mrb[0].mxu0
        %v995 = vadd.f32 0.0, %v994
        %v996 = vpop.f32.mrb[0].mxu0
        %997 = vmatprep.mubr.bf16.mxu0 %v484
        %998 = vmatmul.mubr.bf16.gmra.mrb[0].mxu0 %v483
        %v999 = vpop.f32.mrb[0].mxu0
        %v1000 = vadd.f32 0.0, %v999
        %v1001 = vpop.f32.mrb[0].mxu0
        %v1002 = vpop.f32.mrb[0].mxu0
        %v1003 = vadd.f32 0.0, %v1002
        %v1004 = vpop.f32.mrb[0].mxu0
        %1005 = vmatprep.mubr.bf16.mxu0 %v486
        %1006 = vmatmul.mubr.bf16.gmra.mrb[0].mxu0 %v485
        %v1007 = vpop.f32.mrb[0].mxu0
        %v1008 = vadd.f32 0.0, %v1007
        %v1009 = vpop.f32.mrb[0].mxu0
        %v1010 = vpop.f32.mrb[0].mxu0
        %v1011 = vadd.f32 0.0, %v1010
        %v1012 = vpop.f32.mrb[0].mxu0
        %1013 = vmatprep.mubr.bf16.mxu0 %v488
        %1014 = vmatmul.mubr.bf16.gmra.mrb[0].mxu0 %v487
        %v1015 = vpop.f32.mrb[0].mxu0
        %v1016 = vadd.f32 0.0, %v1015
        %v1017 = vpop.f32.mrb[0].mxu0
        %v1018 = vpop.f32.mrb[0].mxu0
        %v1019 = vadd.f32 0.0, %v1018
        %v1020 = vpop.f32.mrb[0].mxu0
        %1021 = vmatprep.mubr.bf16.mxu0 %v490
        %1022 = vmatmul.mubr.bf16.gmra.mrb[0].mxu0 %v489
        %v1023 = vpop.f32.mrb[0].mxu0
        %v1024 = vadd.f32 0.0, %v1023
        %v1025 = vpop.f32.mrb[0].mxu0
        %v1026 = vpop.f32.mrb[0].mxu0
        %v1027 = vadd.f32 0.0, %v1026
        %v1028 = vpop.f32.mrb[0].mxu0
        %1029 = vmatprep.mubr.bf16.mxu0 %v492
        %1030 = vmatmul.mubr.bf16.gmra.mrb[0].mxu0 %v491
        %v1031 = vpop.f32.mrb[0].mxu0
        %v1032 = vadd.f32 0.0, %v1031
        %v1033 = vpop.f32.mrb[0].mxu0
        %v1034 = vpop.f32.mrb[0].mxu0
        %v1035 = vadd.f32 0.0, %v1034
        %v1036 = vpop.f32.mrb[0].mxu0
        %1037 = vdwg.mxu0
        %v1038 = vld [vmem:[#allocation5] sm:$0xff]
        %v1039 = vld [vmem:[#allocation5 + $0x8] sm:$0xff]
        %v1040 = vld [vmem:[#allocation5 + $0x10] sm:$0xff]
        %v1041 = vld [vmem:[#allocation5 + $0x18] sm:$0xff]
        %v1042 = vld [vmem:[#allocation5 + $0x20] sm:$0xff]
        %v1043 = vld [vmem:[#allocation5 + $0x28] sm:$0xff]
        %v1044 = vld [vmem:[#allocation5 + $0x30] sm:$0xff]
        %v1045 = vld [vmem:[#allocation5 + $0x38] sm:$0xff]
        %v1046 = vld [vmem:[#allocation5 + $0x40] sm:$0xff]
        %v1047 = vld [vmem:[#allocation5 + $0x48] sm:$0xff]
        %v1048 = vld [vmem:[#allocation5 + $0x50] sm:$0xff]
        %v1049 = vld [vmem:[#allocation5 + $0x58] sm:$0xff]
        %v1050 = vld [vmem:[#allocation5 + $0x60] sm:$0xff]
        %v1051 = vld [vmem:[#allocation5 + $0x68] sm:$0xff]
        %v1052 = vpack.c.bf16 %v659, %v656
        %v1053 = vpack.c.bf16 %v667, %v664
        %v1054 = vpack.c.bf16 %v675, %v672
        %v1055 = vpack.c.bf16 %v683, %v680
        %v1056 = vpack.c.bf16 %v691, %v688
        %v1057 = vpack.c.bf16 %v699, %v696
        %v1058 = vpack.c.bf16 %v707, %v704
        %v1059 = vpack.c.bf16 %v715, %v712
        %v1060 = vpack.c.bf16 %v723, %v720
        %v1061 = vpack.c.bf16 %v731, %v728
        %v1062 = vpack.c.bf16 %v739, %v736
        %v1063 = vpack.c.bf16 %v747, %v744
        %v1064 = vpack.c.bf16 %v755, %v752
        %v1065 = vpack.c.bf16 %v763, %v760
        %v1066 = vpack.c.bf16 %v771, %v768
        %v1067 = vpack.c.bf16 %v779, %v776
        %v1082 = vunpack.c.l.b16 %v1038
        %v1083 = vunpack.c.h.b16 %v1038
        %v1084 = vunpack.c.l.b16 %v1039
        %v1085 = vunpack.c.h.b16 %v1039
        %v1086 = vunpack.c.l.b16 %v1040
        %v1087 = vunpack.c.h.b16 %v1040
        %v1088 = vunpack.c.l.b16 %v1041
        %v1089 = vunpack.c.h.b16 %v1041
        %v1090 = vunpack.c.l.b16 %v1042
        %v1091 = vunpack.c.h.b16 %v1042
        %v1092 = vunpack.c.l.b16 %v1043
        %v1093 = vunpack.c.h.b16 %v1043
        %v1094 = vunpack.c.l.b16 %v1044
        %v1095 = vunpack.c.h.b16 %v1044
        %v1096 = vunpack.c.l.b16 %v1045
        %v1097 = vunpack.c.h.b16 %v1045
        %v1098 = vunpack.c.l.b16 %v1046
        %v1099 = vunpack.c.h.b16 %v1046
        %v1100 = vunpack.c.l.b16 %v1047
        %v1101 = vunpack.c.h.b16 %v1047
        %v1102 = vunpack.c.l.b16 %v1048
        %v1103 = vunpack.c.h.b16 %v1048
        %v1104 = vunpack.c.l.b16 %v1049
        %v1105 = vunpack.c.h.b16 %v1049
        %v1106 = vunpack.c.l.b16 %v1050
        %v1107 = vunpack.c.h.b16 %v1050
        %v1108 = vunpack.c.l.b16 %v1051
        %v1109 = vunpack.c.h.b16 %v1051
        %v1110 = vpack.c.b16 %v1084, %v1082
        %v1111 = vpack.c.b16 %v1085, %v1083
        %v1112 = vpack.c.b16 %v1088, %v1086
        %v1113 = vpack.c.b16 %v1089, %v1087
        %v1114 = vpack.c.b16 %v1092, %v1090
        %v1115 = vpack.c.b16 %v1093, %v1091
        %v1116 = vpack.c.b16 %v1096, %v1094
        %v1117 = vpack.c.b16 %v1097, %v1095
        %v1118 = vpack.c.b16 %v1100, %v1098
        %v1119 = vpack.c.b16 %v1101, %v1099
        %v1120 = vpack.c.b16 %v1104, %v1102
        %v1121 = vpack.c.b16 %v1105, %v1103
        %v1122 = vpack.c.b16 %v1108, %v1106
        %v1123 = vpack.c.b16 %v1109, %v1107
        %1138 = vmatprep.subr.bf16.mxu0 0
        %1139 = vmatpush1.bf16.msra.mxu0 %v1052
        %1140 = vmatprep.subr.bf16.mxu0 0
        %1141 = vmatpush1.bf16.msra.mxu0 %v1053
        %1142 = vmatprep.subr.bf16.mxu0 0
        %1143 = vmatpush1.bf16.msra.mxu0 %v1054
        %1144 = vmatprep.subr.bf16.mxu0 0
        %1145 = vmatpush1.bf16.msra.mxu0 %v1055
        %1146 = vmatprep.subr.bf16.mxu0 0
        %1147 = vmatpush1.bf16.msra.mxu0 %v1056
        %1148 = vmatprep.subr.bf16.mxu0 0
        %1149 = vmatpush1.bf16.msra.mxu0 %v1057
        %1150 = vmatprep.subr.bf16.mxu0 0
        %1151 = vmatpush1.bf16.msra.mxu0 %v1058
        %1152 = vmatprep.subr.bf16.mxu0 0
        %1153 = vmatpush1.bf16.msra.mxu0 %v1059
        %1154 = vmatprep.subr.bf16.mxu0 0
        %1155 = vmatpush1.bf16.msra.mxu0 %v1060
        %1156 = vmatprep.subr.bf16.mxu0 0
        %1157 = vmatpush1.bf16.msra.mxu0 %v1061
        %1158 = vmatprep.subr.bf16.mxu0 0
        %1159 = vmatpush1.bf16.msra.mxu0 %v1062
        %1160 = vmatprep.subr.bf16.mxu0 0
        %1161 = vmatpush1.bf16.msra.mxu0 %v1063
        %1162 = vmatprep.subr.bf16.mxu0 0
        %1163 = vmatpush1.bf16.msra.mxu0 %v1064
        %1164 = vmatprep.subr.bf16.mxu0 0
        %1165 = vmatpush1.bf16.msra.mxu0 %v1065
        %1166 = vmatprep.subr.bf16.mxu0 0
        %1167 = vmatpush1.bf16.msra.mxu0 %v1066
        %1168 = vmatprep.subr.bf16.mxu0 0
        %1169 = vmatpush1.bf16.msra.mxu0 %v1067
        %1170 = vmatprep.mubr.bf16.mxu0 %v1111
        %1171 = vmatmul.mubr.bf16.gmra.mrb[0].mxu0 %v1110
        %v1172 = vpop.f32.mrb[0].mxu0
        %v1173 = vadd.f32 0.0, %v1172
        %v1174 = vpop.f32.mrb[0].mxu0
        %v1175 = vpop.f32.mrb[0].mxu0
        %v1176 = vadd.f32 0.0, %v1175
        %v1177 = vpop.f32.mrb[0].mxu0
        %1178 = vmatprep.mubr.bf16.mxu0 %v1113
        %1179 = vmatmul.mubr.bf16.gmra.mrb[0].mxu0 %v1112
        %v1180 = vpop.f32.mrb[0].mxu0
        %v1181 = vadd.f32 0.0, %v1180
        %v1182 = vpop.f32.mrb[0].mxu0
        %v1183 = vpop.f32.mrb[0].mxu0
        %v1184 = vadd.f32 0.0, %v1183
        %v1185 = vpop.f32.mrb[0].mxu0
        %1186 = vmatprep.mubr.bf16.mxu0 %v1115
        %1187 = vmatmul.mubr.bf16.gmra.mrb[0].mxu0 %v1114
        %v1188 = vpop.f32.mrb[0].mxu0
        %v1189 = vadd.f32 0.0, %v1188
        %v1190 = vpop.f32.mrb[0].mxu0
        %v1191 = vpop.f32.mrb[0].mxu0
        %v1192 = vadd.f32 0.0, %v1191
        %v1193 = vpop.f32.mrb[0].mxu0
        %1194 = vmatprep.mubr.bf16.mxu0 %v1117
        %1195 = vmatmul.mubr.bf16.gmra.mrb[0].mxu0 %v1116
        %v1196 = vpop.f32.mrb[0].mxu0
        %v1197 = vadd.f32 0.0, %v1196
        %v1198 = vpop.f32.mrb[0].mxu0
        %v1199 = vpop.f32.mrb[0].mxu0
        %v1200 = vadd.f32 0.0, %v1199
        %v1201 = vpop.f32.mrb[0].mxu0
        %1202 = vmatprep.mubr.bf16.mxu0 %v1119
        %1203 = vmatmul.mubr.bf16.gmra.mrb[0].mxu0 %v1118
        %v1204 = vpop.f32.mrb[0].mxu0
        %v1205 = vadd.f32 0.0, %v1204
        %v1206 = vpop.f32.mrb[0].mxu0
        %v1207 = vpop.f32.mrb[0].mxu0
        %v1208 = vadd.f32 0.0, %v1207
        %v1209 = vpop.f32.mrb[0].mxu0
        %1210 = vmatprep.mubr.bf16.mxu0 %v1121
        %1211 = vmatmul.mubr.bf16.gmra.mrb[0].mxu0 %v1120
        %v1212 = vpop.f32.mrb[0].mxu0
        %v1213 = vadd.f32 0.0, %v1212
        %v1214 = vpop.f32.mrb[0].mxu0
        %v1215 = vpop.f32.mrb[0].mxu0
        %v1216 = vadd.f32 0.0, %v1215
        %v1217 = vpop.f32.mrb[0].mxu0
        %1218 = vmatprep.mubr.bf16.mxu0 %v1123
        %1219 = vmatmul.mubr.bf16.gmra.mrb[0].mxu0 %v1122
        %v1220 = vpop.f32.mrb[0].mxu0
        %v1221 = vadd.f32 0.0, %v1220
        %v1222 = vpop.f32.mrb[0].mxu0
        %v1223 = vpop.f32.mrb[0].mxu0
        %v1224 = vadd.f32 0.0, %v1223
        %v1225 = vpop.f32.mrb[0].mxu0
        %1226 = vdwg.mxu0
        %v1227 = vmul.f32 %v1173, 0.5372591
        %v1228 = vmul.f32 %v1176, 0.5372591
        %v1229 = vmul.f32 %v1181, 0.5372591
        %v1230 = vmul.f32 %v1184, 0.5372591
        %v1231 = vmul.f32 %v1189, 0.5372591
        %v1232 = vmul.f32 %v1192, 0.5372591
        %v1233 = vmul.f32 %v1197, 0.5372591
        %v1234 = vmul.f32 %v1200, 0.5372591
        %v1235 = vmul.f32 %v1205, 0.5372591
        %v1236 = vmul.f32 %v1208, 0.5372591
        %v1237 = vmul.f32 %v1213, 0.5372591
        %v1238 = vmul.f32 %v1216, 0.5372591
        %v1239 = vmul.f32 %v1221, 0.5372591
        %v1240 = vmul.f32 %v1224, 0.5372591
        %v1241 = vadd.f32 %v1227, -0.03709068
        %v1242 = vadd.f32 %v1228, -0.03709068
        %v1243 = vadd.f32 %v1229, -0.03709068
        %v1244 = vadd.f32 %v1230, -0.03709068
        %v1245 = vadd.f32 %v1231, -0.03709068
        %v1246 = vadd.f32 %v1232, -0.03709068
        %v1247 = vadd.f32 %v1233, -0.03709068
        %v1248 = vadd.f32 %v1234, -0.03709068
        %v1249 = vadd.f32 %v1235, -0.03709068
        %v1250 = vadd.f32 %v1236, -0.03709068
        %v1251 = vadd.f32 %v1237, -0.03709068
        %v1252 = vadd.f32 %v1238, -0.03709068
        %v1253 = vadd.f32 %v1239, -0.03709068
        %v1254 = vadd.f32 %v1240, -0.03709068
        %v1255 = vpack.c.bf16 %v1242, %v1241
        %v1256 = vpack.c.bf16 %v1244, %v1243
        %v1257 = vpack.c.bf16 %v1246, %v1245
        %v1258 = vpack.c.bf16 %v1248, %v1247
        %v1259 = vpack.c.bf16 %v1250, %v1249
        %v1260 = vpack.c.bf16 %v1252, %v1251
        %v1261 = vpack.c.bf16 %v1254, %v1253
        %v1269 = vunpack.c.l.b16 %v1255
        %v1270 = vunpack.c.h.b16 %v1255
        %v1271 = vunpack.c.l.b16 %v1256
        %v1272 = vunpack.c.h.b16 %v1256
        %v1273 = vunpack.c.l.b16 %v1257
        %v1274 = vunpack.c.h.b16 %v1257
        %v1275 = vunpack.c.l.b16 %v1258
        %v1276 = vunpack.c.h.b16 %v1258
        %v1277 = vunpack.c.l.b16 %v1259
        %v1278 = vunpack.c.h.b16 %v1259
        %v1279 = vunpack.c.l.b16 %v1260
        %v1280 = vunpack.c.h.b16 %v1260
        %v1281 = vunpack.c.l.b16 %v1261
        %v1282 = vunpack.c.h.b16 %v1261
        %v1283 = vpack.c.b16 %v1269, %v1269
        %v1284 = vpack.c.b16 %v1270, %v1270
        %v1285 = vpack.c.b16 %v1271, %v1271
        %v1286 = vpack.c.b16 %v1272, %v1272
        %v1287 = vpack.c.b16 %v1273, %v1273
        %v1288 = vpack.c.b16 %v1274, %v1274
        %v1289 = vpack.c.b16 %v1275, %v1275
        %v1290 = vpack.c.b16 %v1276, %v1276
        %v1291 = vpack.c.b16 %v1277, %v1277
        %v1292 = vpack.c.b16 %v1278, %v1278
        %v1293 = vpack.c.b16 %v1279, %v1279
        %v1294 = vpack.c.b16 %v1280, %v1280
        %v1295 = vpack.c.b16 %v1281, %v1281
        %v1296 = vpack.c.b16 %v1282, %v1282
        %vm1311 = vcmask 912384
        %1312 = vst.msk [vmem:[%s203] sm:$0xf] %vm1311, %v1283
        %1313 = vst.msk [vmem:[%s203 + $0x4] sm:$0xf] %vm1311, %v1284
        %1314 = vst.msk [vmem:[%s203 + $0x8] sm:$0xf] %vm1311, %v1285
        %1315 = vst.msk [vmem:[%s203 + $0xc] sm:$0xf] %vm1311, %v1286
        %1316 = vst.msk [vmem:[%s203 + $0x10] sm:$0xf] %vm1311, %v1287
        %1317 = vst.msk [vmem:[%s203 + $0x14] sm:$0xf] %vm1311, %v1288
        %1318 = vst.msk [vmem:[%s203 + $0x18] sm:$0xf] %vm1311, %v1289
        %1319 = vst.msk [vmem:[%s203 + $0x1c] sm:$0xf] %vm1311, %v1290
        %1320 = vst.msk [vmem:[%s203 + $0x20] sm:$0xf] %vm1311, %v1291
        %1321 = vst.msk [vmem:[%s203 + $0x24] sm:$0xf] %vm1311, %v1292
        %1322 = vst.msk [vmem:[%s203 + $0x28] sm:$0xf] %vm1311, %v1293
        %1323 = vst.msk [vmem:[%s203 + $0x2c] sm:$0xf] %vm1311, %v1294
        %1324 = vst.msk [vmem:[%s203 + $0x30] sm:$0xf] %vm1311, %v1295
        %1325 = vst.msk [vmem:[%s203 + $0x34] sm:$0xf] %vm1311, %v1296
        %v1326 = vld [vmem:[#allocation5] sm:$0xff]
        %v1327 = vld [vmem:[#allocation5 + $0x8] sm:$0xff]
        %v1328 = vld [vmem:[#allocation5 + $0x10] sm:$0xff]
        %v1329 = vld [vmem:[#allocation5 + $0x18] sm:$0xff]
        %v1330 = vld [vmem:[#allocation5 + $0x20] sm:$0xff]
        %v1331 = vld [vmem:[#allocation5 + $0x28] sm:$0xff]
        %v1332 = vld [vmem:[#allocation5 + $0x30] sm:$0xff]
        %v1333 = vld [vmem:[#allocation5 + $0x38] sm:$0xff]
        %v1334 = vld [vmem:[#allocation5 + $0x40] sm:$0xff]
        %v1335 = vld [vmem:[#allocation5 + $0x48] sm:$0xff]
        %v1336 = vld [vmem:[#allocation5 + $0x50] sm:$0xff]
        %v1337 = vld [vmem:[#allocation5 + $0x58] sm:$0xff]
        %v1338 = vld [vmem:[#allocation5 + $0x60] sm:$0xff]
        %v1339 = vld [vmem:[#allocation5 + $0x68] sm:$0xff]
        %v1340 = vpack.c.bf16 %v787, %v784
        %v1341 = vpack.c.bf16 %v795, %v792
        %v1342 = vpack.c.bf16 %v803, %v800
        %v1343 = vpack.c.bf16 %v811, %v808
        %v1344 = vpack.c.bf16 %v819, %v816
        %v1345 = vpack.c.bf16 %v827, %v824
        %v1346 = vpack.c.bf16 %v835, %v832
        %v1347 = vpack.c.bf16 %v843, %v840
        %v1348 = vpack.c.bf16 %v851, %v848
        %v1349 = vpack.c.bf16 %v859, %v856
        %v1350 = vpack.c.bf16 %v867, %v864
        %v1351 = vpack.c.bf16 %v875, %v872
        %v1352 = vpack.c.bf16 %v883, %v880
        %v1353 = vpack.c.bf16 %v891, %v888
        %v1354 = vpack.c.bf16 %v899, %v896
        %v1355 = vpack.c.bf16 %v907, %v904
        %v1370 = vunpack.c.l.b16 %v1326
        %v1371 = vunpack.c.h.b16 %v1326
        %v1372 = vunpack.c.l.b16 %v1327
        %v1373 = vunpack.c.h.b16 %v1327
        %v1374 = vunpack.c.l.b16 %v1328
        %v1375 = vunpack.c.h.b16 %v1328
        %v1376 = vunpack.c.l.b16 %v1329
        %v1377 = vunpack.c.h.b16 %v1329
        %v1378 = vunpack.c.l.b16 %v1330
        %v1379 = vunpack.c.h.b16 %v1330
        %v1380 = vunpack.c.l.b16 %v1331
        %v1381 = vunpack.c.h.b16 %v1331
        %v1382 = vunpack.c.l.b16 %v1332
        %v1383 = vunpack.c.h.b16 %v1332
        %v1384 = vunpack.c.l.b16 %v1333
        %v1385 = vunpack.c.h.b16 %v1333
        %v1386 = vunpack.c.l.b16 %v1334
        %v1387 = vunpack.c.h.b16 %v1334
        %v1388 = vunpack.c.l.b16 %v1335
        %v1389 = vunpack.c.h.b16 %v1335
        %v1390 = vunpack.c.l.b16 %v1336
        %v1391 = vunpack.c.h.b16 %v1336
        %v1392 = vunpack.c.l.b16 %v1337
        %v1393 = vunpack.c.h.b16 %v1337
        %v1394 = vunpack.c.l.b16 %v1338
        %v1395 = vunpack.c.h.b16 %v1338
        %v1396 = vunpack.c.l.b16 %v1339
        %v1397 = vunpack.c.h.b16 %v1339
        %v1398 = vpack.c.b16 %v1372, %v1370
        %v1399 = vpack.c.b16 %v1373, %v1371
        %v1400 = vpack.c.b16 %v1376, %v1374
        %v1401 = vpack.c.b16 %v1377, %v1375
        %v1402 = vpack.c.b16 %v1380, %v1378
        %v1403 = vpack.c.b16 %v1381, %v1379
        %v1404 = vpack.c.b16 %v1384, %v1382
        %v1405 = vpack.c.b16 %v1385, %v1383
        %v1406 = vpack.c.b16 %v1388, %v1386
        %v1407 = vpack.c.b16 %v1389, %v1387
        %v1408 = vpack.c.b16 %v1392, %v1390
        %v1409 = vpack.c.b16 %v1393, %v1391
        %v1410 = vpack.c.b16 %v1396, %v1394
        %v1411 = vpack.c.b16 %v1397, %v1395
        %1426 = vmatprep.subr.bf16.mxu0 0
        %1427 = vmatpush1.bf16.msra.mxu0 %v1340
        %1428 = vmatprep.subr.bf16.mxu0 0
        %1429 = vmatpush1.bf16.msra.mxu0 %v1341
        %1430 = vmatprep.subr.bf16.mxu0 0
        %1431 = vmatpush1.bf16.msra.mxu0 %v1342
        %1432 = vmatprep.subr.bf16.mxu0 0
        %1433 = vmatpush1.bf16.msra.mxu0 %v1343
        %1434 = vmatprep.subr.bf16.mxu0 0
        %1435 = vmatpush1.bf16.msra.mxu0 %v1344
        %1436 = vmatprep.subr.bf16.mxu0 0
        %1437 = vmatpush1.bf16.msra.mxu0 %v1345
        %1438 = vmatprep.subr.bf16.mxu0 0
        %1439 = vmatpush1.bf16.msra.mxu0 %v1346
        %1440 = vmatprep.subr.bf16.mxu0 0
        %1441 = vmatpush1.bf16.msra.mxu0 %v1347
        %1442 = vmatprep.subr.bf16.mxu0 0
        %1443 = vmatpush1.bf16.msra.mxu0 %v1348
        %1444 = vmatprep.subr.bf16.mxu0 0
        %1445 = vmatpush1.bf16.msra.mxu0 %v1349
        %1446 = vmatprep.subr.bf16.mxu0 0
        %1447 = vmatpush1.bf16.msra.mxu0 %v1350
        %1448 = vmatprep.subr.bf16.mxu0 0
        %1449 = vmatpush1.bf16.msra.mxu0 %v1351
        %1450 = vmatprep.subr.bf16.mxu0 0
        %1451 = vmatpush1.bf16.msra.mxu0 %v1352
        %1452 = vmatprep.subr.bf16.mxu0 0
        %1453 = vmatpush1.bf16.msra.mxu0 %v1353
        %1454 = vmatprep.subr.bf16.mxu0 0
        %1455 = vmatpush1.bf16.msra.mxu0 %v1354
        %1456 = vmatprep.subr.bf16.mxu0 0
        %1457 = vmatpush1.bf16.msra.mxu0 %v1355
        %1458 = vmatprep.mubr.bf16.mxu0 %v1399
        %1459 = vmatmul.mubr.bf16.gmra.mrb[0].mxu0 %v1398
        %v1460 = vpop.f32.mrb[0].mxu0
        %v1461 = vadd.f32 0.0, %v1460
        %v1462 = vpop.f32.mrb[0].mxu0
        %v1463 = vpop.f32.mrb[0].mxu0
        %v1464 = vadd.f32 0.0, %v1463
        %v1465 = vpop.f32.mrb[0].mxu0
        %1466 = vmatprep.mubr.bf16.mxu0 %v1401
        %1467 = vmatmul.mubr.bf16.gmra.mrb[0].mxu0 %v1400
        %v1468 = vpop.f32.mrb[0].mxu0
        %v1469 = vadd.f32 0.0, %v1468
        %v1470 = vpop.f32.mrb[0].mxu0
        %v1471 = vpop.f32.mrb[0].mxu0
        %v1472 = vadd.f32 0.0, %v1471
        %v1473 = vpop.f32.mrb[0].mxu0
        %1474 = vmatprep.mubr.bf16.mxu0 %v1403
        %1475 = vmatmul.mubr.bf16.gmra.mrb[0].mxu0 %v1402
        %v1476 = vpop.f32.mrb[0].mxu0
        %v1477 = vadd.f32 0.0, %v1476
        %v1478 = vpop.f32.mrb[0].mxu0
        %v1479 = vpop.f32.mrb[0].mxu0
        %v1480 = vadd.f32 0.0, %v1479
        %v1481 = vpop.f32.mrb[0].mxu0
        %1482 = vmatprep.mubr.bf16.mxu0 %v1405
        %1483 = vmatmul.mubr.bf16.gmra.mrb[0].mxu0 %v1404
        %v1484 = vpop.f32.mrb[0].mxu0
        %v1485 = vadd.f32 0.0, %v1484
        %v1486 = vpop.f32.mrb[0].mxu0
        %v1487 = vpop.f32.mrb[0].mxu0
        %v1488 = vadd.f32 0.0, %v1487
        %v1489 = vpop.f32.mrb[0].mxu0
        %1490 = vmatprep.mubr.bf16.mxu0 %v1407
        %1491 = vmatmul.mubr.bf16.gmra.mrb[0].mxu0 %v1406
        %v1492 = vpop.f32.mrb[0].mxu0
        %v1493 = vadd.f32 0.0, %v1492
        %v1494 = vpop.f32.mrb[0].mxu0
        %v1495 = vpop.f32.mrb[0].mxu0
        %v1496 = vadd.f32 0.0, %v1495
        %v1497 = vpop.f32.mrb[0].mxu0
        %1498 = vmatprep.mubr.bf16.mxu0 %v1409
        %1499 = vmatmul.mubr.bf16.gmra.mrb[0].mxu0 %v1408
        %v1500 = vpop.f32.mrb[0].mxu0
        %v1501 = vadd.f32 0.0, %v1500
        %v1502 = vpop.f32.mrb[0].mxu0
        %v1503 = vpop.f32.mrb[0].mxu0
        %v1504 = vadd.f32 0.0, %v1503
        %v1505 = vpop.f32.mrb[0].mxu0
        %1506 = vmatprep.mubr.bf16.mxu0 %v1411
        %1507 = vmatmul.mubr.bf16.gmra.mrb[0].mxu0 %v1410
        %v1508 = vpop.f32.mrb[0].mxu0
        %v1509 = vadd.f32 0.0, %v1508
        %v1510 = vpop.f32.mrb[0].mxu0
        %v1511 = vpop.f32.mrb[0].mxu0
        %v1512 = vadd.f32 0.0, %v1511
        %v1513 = vpop.f32.mrb[0].mxu0
        %1514 = vdwg.mxu0
        %v1515 = vmul.f32 %v1461, 0.5226052
        %v1516 = vmul.f32 %v1464, 0.5226052
        %v1517 = vmul.f32 %v1469, 0.5226052
        %v1518 = vmul.f32 %v1472, 0.5226052
        %v1519 = vmul.f32 %v1477, 0.5226052
        %v1520 = vmul.f32 %v1480, 0.5226052
        %v1521 = vmul.f32 %v1485, 0.5226052
        %v1522 = vmul.f32 %v1488, 0.5226052
        %v1523 = vmul.f32 %v1493, 0.5226052
        %v1524 = vmul.f32 %v1496, 0.5226052
        %v1525 = vmul.f32 %v1501, 0.5226052
        %v1526 = vmul.f32 %v1504, 0.5226052
        %v1527 = vmul.f32 %v1509, 0.5226052
        %v1528 = vmul.f32 %v1512, 0.5226052
        %v1529 = vadd.f32 %v1515, -0.084345
        %v1530 = vadd.f32 %v1516, -0.084345
        %v1531 = vadd.f32 %v1517, -0.084345
        %v1532 = vadd.f32 %v1518, -0.084345
        %v1533 = vadd.f32 %v1519, -0.084345
        %v1534 = vadd.f32 %v1520, -0.084345
        %v1535 = vadd.f32 %v1521, -0.084345
        %v1536 = vadd.f32 %v1522, -0.084345
        %v1537 = vadd.f32 %v1523, -0.084345
        %v1538 = vadd.f32 %v1524, -0.084345
        %v1539 = vadd.f32 %v1525, -0.084345
        %v1540 = vadd.f32 %v1526, -0.084345
        %v1541 = vadd.f32 %v1527, -0.084345
        %v1542 = vadd.f32 %v1528, -0.084345
        %v1543 = vpack.c.bf16 %v1530, %v1529
        %v1544 = vpack.c.bf16 %v1532, %v1531
        %v1545 = vpack.c.bf16 %v1534, %v1533
        %v1546 = vpack.c.bf16 %v1536, %v1535
        %v1547 = vpack.c.bf16 %v1538, %v1537
        %v1548 = vpack.c.bf16 %v1540, %v1539
        %v1549 = vpack.c.bf16 %v1542, %v1541
        %v1557 = vunpack.c.l.b16 %v1543
        %v1558 = vunpack.c.h.b16 %v1543
        %v1559 = vunpack.c.l.b16 %v1544
        %v1560 = vunpack.c.h.b16 %v1544
        %v1561 = vunpack.c.l.b16 %v1545
        %v1562 = vunpack.c.h.b16 %v1545
        %v1563 = vunpack.c.l.b16 %v1546
        %v1564 = vunpack.c.h.b16 %v1546
        %v1565 = vunpack.c.l.b16 %v1547
        %v1566 = vunpack.c.h.b16 %v1547
        %v1567 = vunpack.c.l.b16 %v1548
        %v1568 = vunpack.c.h.b16 %v1548
        %v1569 = vunpack.c.l.b16 %v1549
        %v1570 = vunpack.c.h.b16 %v1549
        %v1571 = vpack.c.b16 %v1557, %v1557
        %v1572 = vpack.c.b16 %v1558, %v1558
        %v1573 = vpack.c.b16 %v1559, %v1559
        %v1574 = vpack.c.b16 %v1560, %v1560
        %v1575 = vpack.c.b16 %v1561, %v1561
        %v1576 = vpack.c.b16 %v1562, %v1562
        %v1577 = vpack.c.b16 %v1563, %v1563
        %v1578 = vpack.c.b16 %v1564, %v1564
        %v1579 = vpack.c.b16 %v1565, %v1565
        %v1580 = vpack.c.b16 %v1566, %v1566
        %v1581 = vpack.c.b16 %v1567, %v1567
        %v1582 = vpack.c.b16 %v1568, %v1568
        %v1583 = vpack.c.b16 %v1569, %v1569
        %v1584 = vpack.c.b16 %v1570, %v1570
        %s1599 = scalar_lea.vmem %s203, 56 [#allocation7]
        %1600 = vst.msk [vmem:[%s1599] sm:$0xf] %vm1311, %v1571
        %1601 = vst.msk [vmem:[%s1599 + $0x4] sm:$0xf] %vm1311, %v1572
        %1602 = vst.msk [vmem:[%s1599 + $0x8] sm:$0xf] %vm1311, %v1573
        %1603 = vst.msk [vmem:[%s1599 + $0xc] sm:$0xf] %vm1311, %v1574
        %1604 = vst.msk [vmem:[%s1599 + $0x10] sm:$0xf] %vm1311, %v1575
        %1605 = vst.msk [vmem:[%s1599 + $0x14] sm:$0xf] %vm1311, %v1576
        %1606 = vst.msk [vmem:[%s1599 + $0x18] sm:$0xf] %vm1311, %v1577
        %1607 = vst.msk [vmem:[%s1599 + $0x1c] sm:$0xf] %vm1311, %v1578
        %1608 = vst.msk [vmem:[%s1599 + $0x20] sm:$0xf] %vm1311, %v1579
        %1609 = vst.msk [vmem:[%s1599 + $0x24] sm:$0xf] %vm1311, %v1580
        %1610 = vst.msk [vmem:[%s1599 + $0x28] sm:$0xf] %vm1311, %v1581
        %1611 = vst.msk [vmem:[%s1599 + $0x2c] sm:$0xf] %vm1311, %v1582
        %1612 = vst.msk [vmem:[%s1599 + $0x30] sm:$0xf] %vm1311, %v1583
        %1613 = vst.msk [vmem:[%s1599 + $0x34] sm:$0xf] %vm1311, %v1584
        %v1614 = vld [vmem:[#allocation5] sm:$0xff]
        %v1615 = vld [vmem:[#allocation5 + $0x8] sm:$0xff]
        %v1616 = vld [vmem:[#allocation5 + $0x10] sm:$0xff]
        %v1617 = vld [vmem:[#allocation5 + $0x18] sm:$0xff]
        %v1618 = vld [vmem:[#allocation5 + $0x20] sm:$0xff]
        %v1619 = vld [vmem:[#allocation5 + $0x28] sm:$0xff]
        %v1620 = vld [vmem:[#allocation5 + $0x30] sm:$0xff]
        %v1621 = vld [vmem:[#allocation5 + $0x38] sm:$0xff]
        %v1622 = vld [vmem:[#allocation5 + $0x40] sm:$0xff]
        %v1623 = vld [vmem:[#allocation5 + $0x48] sm:$0xff]
        %v1624 = vld [vmem:[#allocation5 + $0x50] sm:$0xff]
        %v1625 = vld [vmem:[#allocation5 + $0x58] sm:$0xff]
        %v1626 = vld [vmem:[#allocation5 + $0x60] sm:$0xff]
        %v1627 = vld [vmem:[#allocation5 + $0x68] sm:$0xff]
        %v1628 = vpack.c.bf16 %v915, %v912
        %v1629 = vpack.c.bf16 %v923, %v920
        %v1630 = vpack.c.bf16 %v931, %v928
        %v1631 = vpack.c.bf16 %v939, %v936
        %v1632 = vpack.c.bf16 %v947, %v944
        %v1633 = vpack.c.bf16 %v955, %v952
        %v1634 = vpack.c.bf16 %v963, %v960
        %v1635 = vpack.c.bf16 %v971, %v968
        %v1636 = vpack.c.bf16 %v979, %v976
        %v1637 = vpack.c.bf16 %v987, %v984
        %v1638 = vpack.c.bf16 %v995, %v992
        %v1639 = vpack.c.bf16 %v1003, %v1000
        %v1640 = vpack.c.bf16 %v1011, %v1008
        %v1641 = vpack.c.bf16 %v1019, %v1016
        %v1642 = vpack.c.bf16 %v1027, %v1024
        %v1643 = vpack.c.bf16 %v1035, %v1032
        %v1658 = vunpack.c.l.b16 %v1614
        %v1659 = vunpack.c.h.b16 %v1614
        %v1660 = vunpack.c.l.b16 %v1615
        %v1661 = vunpack.c.h.b16 %v1615
        %v1662 = vunpack.c.l.b16 %v1616
        %v1663 = vunpack.c.h.b16 %v1616
        %v1664 = vunpack.c.l.b16 %v1617
        %v1665 = vunpack.c.h.b16 %v1617
        %v1666 = vunpack.c.l.b16 %v1618
        %v1667 = vunpack.c.h.b16 %v1618
        %v1668 = vunpack.c.l.b16 %v1619
        %v1669 = vunpack.c.h.b16 %v1619
        %v1670 = vunpack.c.l.b16 %v1620
        %v1671 = vunpack.c.h.b16 %v1620
        %v1672 = vunpack.c.l.b16 %v1621
        %v1673 = vunpack.c.h.b16 %v1621
        %v1674 = vunpack.c.l.b16 %v1622
        %v1675 = vunpack.c.h.b16 %v1622
        %v1676 = vunpack.c.l.b16 %v1623
        %v1677 = vunpack.c.h.b16 %v1623
        %v1678 = vunpack.c.l.b16 %v1624
        %v1679 = vunpack.c.h.b16 %v1624
        %v1680 = vunpack.c.l.b16 %v1625
        %v1681 = vunpack.c.h.b16 %v1625
        %v1682 = vunpack.c.l.b16 %v1626
        %v1683 = vunpack.c.h.b16 %v1626
        %v1684 = vunpack.c.l.b16 %v1627
        %v1685 = vunpack.c.h.b16 %v1627
        %v1686 = vpack.c.b16 %v1660, %v1658
        %v1687 = vpack.c.b16 %v1661, %v1659
        %v1688 = vpack.c.b16 %v1664, %v1662
        %v1689 = vpack.c.b16 %v1665, %v1663
        %v1690 = vpack.c.b16 %v1668, %v1666
        %v1691 = vpack.c.b16 %v1669, %v1667
        %v1692 = vpack.c.b16 %v1672, %v1670
        %v1693 = vpack.c.b16 %v1673, %v1671
        %v1694 = vpack.c.b16 %v1676, %v1674
        %v1695 = vpack.c.b16 %v1677, %v1675
        %v1696 = vpack.c.b16 %v1680, %v1678
        %v1697 = vpack.c.b16 %v1681, %v1679
        %v1698 = vpack.c.b16 %v1684, %v1682
        %v1699 = vpack.c.b16 %v1685, %v1683
        %1714 = vmatprep.subr.bf16.mxu0 0
        %1715 = vmatpush1.bf16.msra.mxu0 %v1628
        %1716 = vmatprep.subr.bf16.mxu0 0
        %1717 = vmatpush1.bf16.msra.mxu0 %v1629
        %1718 = vmatprep.subr.bf16.mxu0 0
        %1719 = vmatpush1.bf16.msra.mxu0 %v1630
        %1720 = vmatprep.subr.bf16.mxu0 0
        %1721 = vmatpush1.bf16.msra.mxu0 %v1631
        %1722 = vmatprep.subr.bf16.mxu0 0
        %1723 = vmatpush1.bf16.msra.mxu0 %v1632
        %1724 = vmatprep.subr.bf16.mxu0 0
        %1725 = vmatpush1.bf16.msra.mxu0 %v1633
        %1726 = vmatprep.subr.bf16.mxu0 0
        %1727 = vmatpush1.bf16.msra.mxu0 %v1634
        %1728 = vmatprep.subr.bf16.mxu0 0
        %1729 = vmatpush1.bf16.msra.mxu0 %v1635
        %1730 = vmatprep.subr.bf16.mxu0 0
        %1731 = vmatpush1.bf16.msra.mxu0 %v1636
        %1732 = vmatprep.subr.bf16.mxu0 0
        %1733 = vmatpush1.bf16.msra.mxu0 %v1637
        %1734 = vmatprep.subr.bf16.mxu0 0
        %1735 = vmatpush1.bf16.msra.mxu0 %v1638
        %1736 = vmatprep.subr.bf16.mxu0 0
        %1737 = vmatpush1.bf16.msra.mxu0 %v1639
        %1738 = vmatprep.subr.bf16.mxu0 0
        %1739 = vmatpush1.bf16.msra.mxu0 %v1640
        %1740 = vmatprep.subr.bf16.mxu0 0
        %1741 = vmatpush1.bf16.msra.mxu0 %v1641
        %1742 = vmatprep.subr.bf16.mxu0 0
        %1743 = vmatpush1.bf16.msra.mxu0 %v1642
        %1744 = vmatprep.subr.bf16.mxu0 0
        %1745 = vmatpush1.bf16.msra.mxu0 %v1643
        %1746 = vmatprep.mubr.bf16.mxu0 %v1687
        %1747 = vmatmul.mubr.bf16.gmra.mrb[0].mxu0 %v1686
        %v1748 = vpop.f32.mrb[0].mxu0
        %v1749 = vadd.f32 0.0, %v1748
        %v1750 = vpop.f32.mrb[0].mxu0
        %v1751 = vpop.f32.mrb[0].mxu0
        %v1752 = vadd.f32 0.0, %v1751
        %v1753 = vpop.f32.mrb[0].mxu0
        %1754 = vmatprep.mubr.bf16.mxu0 %v1689
        %1755 = vmatmul.mubr.bf16.gmra.mrb[0].mxu0 %v1688
        %v1756 = vpop.f32.mrb[0].mxu0
        %v1757 = vadd.f32 0.0, %v1756
        %v1758 = vpop.f32.mrb[0].mxu0
        %v1759 = vpop.f32.mrb[0].mxu0
        %v1760 = vadd.f32 0.0, %v1759
        %v1761 = vpop.f32.mrb[0].mxu0
        %1762 = vmatprep.mubr.bf16.mxu0 %v1691
        %1763 = vmatmul.mubr.bf16.gmra.mrb[0].mxu0 %v1690
        %v1764 = vpop.f32.mrb[0].mxu0
        %v1765 = vadd.f32 0.0, %v1764
        %v1766 = vpop.f32.mrb[0].mxu0
        %v1767 = vpop.f32.mrb[0].mxu0
        %v1768 = vadd.f32 0.0, %v1767
        %v1769 = vpop.f32.mrb[0].mxu0
        %1770 = vmatprep.mubr.bf16.mxu0 %v1693
        %1771 = vmatmul.mubr.bf16.gmra.mrb[0].mxu0 %v1692
        %v1772 = vpop.f32.mrb[0].mxu0
        %v1773 = vadd.f32 0.0, %v1772
        %v1774 = vpop.f32.mrb[0].mxu0
        %v1775 = vpop.f32.mrb[0].mxu0
        %v1776 = vadd.f32 0.0, %v1775
        %v1777 = vpop.f32.mrb[0].mxu0
        %1778 = vmatprep.mubr.bf16.mxu0 %v1695
        %1779 = vmatmul.mubr.bf16.gmra.mrb[0].mxu0 %v1694
        %v1780 = vpop.f32.mrb[0].mxu0
        %v1781 = vadd.f32 0.0, %v1780
        %v1782 = vpop.f32.mrb[0].mxu0
        %v1783 = vpop.f32.mrb[0].mxu0
        %v1784 = vadd.f32 0.0, %v1783
        %v1785 = vpop.f32.mrb[0].mxu0
        %1786 = vmatprep.mubr.bf16.mxu0 %v1697
        %1787 = vmatmul.mubr.bf16.gmra.mrb[0].mxu0 %v1696
        %v1788 = vpop.f32.mrb[0].mxu0
        %v1789 = vadd.f32 0.0, %v1788
        %v1790 = vpop.f32.mrb[0].mxu0
        %v1791 = vpop.f32.mrb[0].mxu0
        %v1792 = vadd.f32 0.0, %v1791
        %v1793 = vpop.f32.mrb[0].mxu0
        %1794 = vmatprep.mubr.bf16.mxu0 %v1699
        %1795 = vmatmul.mubr.bf16.gmra.mrb[0].mxu0 %v1698
        %v1796 = vpop.f32.mrb[0].mxu0
        %v1797 = vadd.f32 0.0, %v1796
        %v1798 = vpop.f32.mrb[0].mxu0
        %v1799 = vpop.f32.mrb[0].mxu0
        %v1800 = vadd.f32 0.0, %v1799
        %v1801 = vpop.f32.mrb[0].mxu0
        %1802 = vdwg.mxu0
        %v1803 = vmul.f32 %v1749, 0.5515542
        %v1804 = vmul.f32 %v1752, 0.5515542
        %v1805 = vmul.f32 %v1757, 0.5515542
        %v1806 = vmul.f32 %v1760, 0.5515542
        %v1807 = vmul.f32 %v1765, 0.5515542
        %v1808 = vmul.f32 %v1768, 0.5515542
        %v1809 = vmul.f32 %v1773, 0.5515542
        %v1810 = vmul.f32 %v1776, 0.5515542
        %v1811 = vmul.f32 %v1781, 0.5515542
        %v1812 = vmul.f32 %v1784, 0.5515542
        %v1813 = vmul.f32 %v1789, 0.5515542
        %v1814 = vmul.f32 %v1792, 0.5515542
        %v1815 = vmul.f32 %v1797, 0.5515542
        %v1816 = vmul.f32 %v1800, 0.5515542
        %v1817 = vadd.f32 %v1803, -0.18357854
        %v1818 = vadd.f32 %v1804, -0.18357854
        %v1819 = vadd.f32 %v1805, -0.18357854
        %v1820 = vadd.f32 %v1806, -0.18357854
        %v1821 = vadd.f32 %v1807, -0.18357854
        %v1822 = vadd.f32 %v1808, -0.18357854
        %v1823 = vadd.f32 %v1809, -0.18357854
        %v1824 = vadd.f32 %v1810, -0.18357854
        %v1825 = vadd.f32 %v1811, -0.18357854
        %v1826 = vadd.f32 %v1812, -0.18357854
        %v1827 = vadd.f32 %v1813, -0.18357854
        %v1828 = vadd.f32 %v1814, -0.18357854
        %v1829 = vadd.f32 %v1815, -0.18357854
        %v1830 = vadd.f32 %v1816, -0.18357854
        %v1831 = vpack.c.bf16 %v1818, %v1817
        %v1832 = vpack.c.bf16 %v1820, %v1819
        %v1833 = vpack.c.bf16 %v1822, %v1821
        %v1834 = vpack.c.bf16 %v1824, %v1823
        %v1835 = vpack.c.bf16 %v1826, %v1825
        %v1836 = vpack.c.bf16 %v1828, %v1827
        %v1837 = vpack.c.bf16 %v1830, %v1829
        %v1845 = vunpack.c.l.b16 %v1831
        %v1846 = vunpack.c.h.b16 %v1831
        %v1847 = vunpack.c.l.b16 %v1832
        %v1848 = vunpack.c.h.b16 %v1832
        %v1849 = vunpack.c.l.b16 %v1833
        %v1850 = vunpack.c.h.b16 %v1833
        %v1851 = vunpack.c.l.b16 %v1834
        %v1852 = vunpack.c.h.b16 %v1834
        %v1853 = vunpack.c.l.b16 %v1835
        %v1854 = vunpack.c.h.b16 %v1835
        %v1855 = vunpack.c.l.b16 %v1836
        %v1856 = vunpack.c.h.b16 %v1836
        %v1857 = vunpack.c.l.b16 %v1837
        %v1858 = vunpack.c.h.b16 %v1837
        %v1859 = vpack.c.b16 %v1845, %v1845
        %v1860 = vpack.c.b16 %v1846, %v1846
        %v1861 = vpack.c.b16 %v1847, %v1847
        %v1862 = vpack.c.b16 %v1848, %v1848
        %v1863 = vpack.c.b16 %v1849, %v1849
        %v1864 = vpack.c.b16 %v1850, %v1850
        %v1865 = vpack.c.b16 %v1851, %v1851
        %v1866 = vpack.c.b16 %v1852, %v1852
        %v1867 = vpack.c.b16 %v1853, %v1853
        %v1868 = vpack.c.b16 %v1854, %v1854
        %v1869 = vpack.c.b16 %v1855, %v1855
        %v1870 = vpack.c.b16 %v1856, %v1856
        %v1871 = vpack.c.b16 %v1857, %v1857
        %v1872 = vpack.c.b16 %v1858, %v1858
        %s1887 = scalar_lea.vmem %s203, 112 [#allocation7]
        %1888 = vst.msk [vmem:[%s1887] sm:$0xf] %vm1311, %v1859
        %1889 = vst.msk [vmem:[%s1887 + $0x4] sm:$0xf] %vm1311, %v1860
        %1890 = vst.msk [vmem:[%s1887 + $0x8] sm:$0xf] %vm1311, %v1861
        %1891 = vst.msk [vmem:[%s1887 + $0xc] sm:$0xf] %vm1311, %v1862
        %1892 = vst.msk [vmem:[%s1887 + $0x10] sm:$0xf] %vm1311, %v1863
        %1893 = vst.msk [vmem:[%s1887 + $0x14] sm:$0xf] %vm1311, %v1864
        %1894 = vst.msk [vmem:[%s1887 + $0x18] sm:$0xf] %vm1311, %v1865
        %1895 = vst.msk [vmem:[%s1887 + $0x1c] sm:$0xf] %vm1311, %v1866
        %1896 = vst.msk [vmem:[%s1887 + $0x20] sm:$0xf] %vm1311, %v1867
        %1897 = vst.msk [vmem:[%s1887 + $0x24] sm:$0xf] %vm1311, %v1868
        %1898 = vst.msk [vmem:[%s1887 + $0x28] sm:$0xf] %vm1311, %v1869
        %1899 = vst.msk [vmem:[%s1887 + $0x2c] sm:$0xf] %vm1311, %v1870
        %1900 = vst.msk [vmem:[%s1887 + $0x30] sm:$0xf] %vm1311, %v1871
        %1901 = vst.msk [vmem:[%s1887 + $0x34] sm:$0xf] %vm1311, %v1872
        %s1902 = sand.u32 %s97, 1
        %s1903 = scalar_lea.sflag [#allocation4], %s1902
        %s1904 = sand.u32 %s97, 1
        %s1905 = smul.addr %s1904, 168
        %s1906 = scalar_lea.vmem [#allocation7], %s1905
        // Predicated region
        $region41: #{tpu_custom_call.1} parent=31 // pred_check
          %p1907 = pneg %p107
        $region42: #{tpu_custom_call.1} parent=31 // pred_check_branch
          %1909 = sbr.rel (%p1907) target = $region44
        $region43: #{tpu_custom_call.1} parent=31 // pred_region
          %s1911 = ssub.s32 2688, 2688
          %1912 = vsyncadd %s1903, %s1911
          %s1913 = smul.addr %s21, 42
          %s1914 = smul.addr %s1913, 64
          %s1915 = scalar_lea.hbm %s3, %s1914
          %s1916 = sshll.u32 %s1906, 4
          %s1917 = int_to_ptr.vmem [resolvable:$true] %s1916
          %1922 = dma.vmem_to_hbm [thread:$0]  %s1917, 2688, %s1915, %s1903, 64, 64, 4
        $region44: #{tpu_custom_call.1} parent=31 // pred_fallthru
          _
      $region32: #{tpu_custom_call.1} parent=5 // pred_fallthru
        _
      %p1923 = scmp.le.s32.totalorder 2, %s16
      // Predicated region
      $region45: #{tpu_custom_call.1} parent=5 // pred_check
        %p1924 = pneg %p1923
      $region46: #{tpu_custom_call.1} parent=5 // pred_check_branch
        %1926 = sbr.rel (%p1924) target = $region48
      $region47: #{tpu_custom_call.1} parent=5 // pred_region
        %s1927 = ssub.s32 %s16, 2
        // Predicated region
        $region49: #{tpu_custom_call.1} parent=47 // pred_check
          %p1928 = pneg %p113
        $region50: #{tpu_custom_call.1} parent=47 // pred_check_branch
          %1930 = sbr.rel (%p1928) target = $region52
        $region51: #{tpu_custom_call.1} parent=47 // pred_region
          %s1931 = sand.u32 %s98, 1
          %s1932 = scalar_lea.sflag [#allocation4], %s1931
          %s1933 = sand.u32 %s98, 1
          %s1934 = smul.addr %s1933, 168
          %s1935 = scalar_lea.vmem [#allocation7], %s1934
          %1936 = dma.done %s1932, 2688
        $region52: #{tpu_custom_call.1} parent=47 // pred_fallthru
          _
      $region48: #{tpu_custom_call.1} parent=5 // pred_fallthru
        _
    $region6: #{tpu_custom_call.1} parent=1 // loop_footer
      %s20 = sadd.s32 1, %s16
    $region7: #{tpu_custom_call.1} parent=1 // loop_footer_branch
      %15 = sbr.rel target = $region3
    $region8: #{tpu_custom_call.1} parent=1 // loop_exit
      _
    %1937 = vsyncpa [#allocation3], 1
    %s1938 = scalar_lea.sflag [#allocation3], 1
    %1939 = vsyncpa %s1938, 1
    %1940 = vsyncpa [#allocation6], 1
    %1941 = vsyncpa [#allocation4], 1
    %s1942 = scalar_lea.sflag [#allocation4], 1
    %1943 = vsyncpa %s1942, 1

</llo_original>
